<compile_context>
chip_gen: v6e
topology: v6e:2x2x1
jax: 0.10.0
libtpu: 0.0.40
codegen_flags: <defaults>
</compile_context>

<pallas_src>
import functools

import numpy as np
import jax
import jax.numpy as jnp
from jax.experimental import pallas as pl
from jax.experimental.pallas import tpu as pltpu

_NEG = -1e30  # "no ReLU" floor


def _round_up(x, m):
    return (x + m - 1) // m * m


# ----------------------------- Pallas kernel ------------------------------ #
def _rfb_kernel(c, cpad, cout, hw, t, needs_mask, cc,
                x_ref, w_ref, b_ref, f_ref, o_ref, acc_ref):
    k = pl.program_id(1)               # H*W reduction axis ("arbitrary", last)
    nk = pl.num_programs(1)

    @pl.when(k == 0)
    def _init():
        acc_ref[...] = jnp.zeros_like(acc_ref)

    n_slabs = t // 128

    def accumulate(masked):
        # Partial global-average-pool: fold this H*W tile into [nb, C, 128]
        # with pure VPU adds of 128-lane slabs (single cross-lane reduce only
        # at the very end).  Channel-chunked so the live partial is bounded.
        for c0 in range(0, c, cc):
            c1 = min(c0 + cc, c)
            part = None
            for j in range(n_slabs):
                slab = x_ref[:, c0:c1, pl.ds(j * 128, 128)].astype(jnp.float32)
                if masked:
                    lane = jax.lax.broadcasted_iota(jnp.int32, slab.shape, 2)
                    gidx = k * t + j * 128 + lane
                    slab = jnp.where(gidx < hw, slab, 0.0)
                part = slab if part is None else part + slab
            acc_ref[:, c0:c1, :] += part

    if needs_mask:
        # Only the last H*W tile can run past hw; interior tiles stay unmasked.
        @pl.when(k == nk - 1)
        def _tail():
            accumulate(True)

        @pl.when(k != nk - 1)
        def _body():
            accumulate(False)
    else:
        accumulate(False)

    @pl.when(k == nk - 1)
    def _finish():
        # Finish GAP: one cross-lane reduce + multiply by 1/(H*W).
        g = jnp.sum(acc_ref[...], axis=-1) * (1.0 / float(hw))   # [nb, cpad]
        n_stages = w_ref.shape[0]
        # Stage 1 consumes the pooled vector (rows >= C of the stage-0 weight
        # are zero); stages 2..5 run on the packed [nb, D] state.
        h = jnp.dot(g, w_ref[0, :cpad, :], preferred_element_type=jnp.float32)
        h = jnp.maximum(h + b_ref[0], f_ref[0])
        for s in range(1, n_stages):
            h = jnp.dot(h, w_ref[s], preferred_element_type=jnp.float32)
            h = jnp.maximum(h + b_ref[s], f_ref[s])
        o_ref[...] = h[:, :cout].reshape(o_ref.shape)


# ------------------------------- Wrapper ---------------------------------- #
def basic_rfb_forward(x, wslab, brow, frow, out_planes, hw_tile=None):
    """x: [N, C, H, W] NCHW (f32 or bf16).  Returns [N, out_planes, 1, 1]."""
    n, c, h, w = x.shape
    hw = h * w
    cpad = _round_up(c, 8)
    d = wslab.shape[-1]
    out_planes = int(out_planes)
    esize = jnp.dtype(x.dtype).itemsize

    # Leading "parallel" batch axis -> both TensorCores on v7x; harmless
    # sequential loop on single-TC v5e/v6e.
    if n >= 2 and n % 2 == 0:
        n_bb, nb = 2, n // 2
    else:
        n_bb, nb = 1, n

    hw128 = _round_up(hw, 128)

    # VMEM budget, conservative for v7x's 64 MiB; larger chips just keep slack.
    try:
        vmem_cap = int(pltpu.get_tpu_info().vmem_capacity_bytes)
    except Exception:
        vmem_cap = 64 * 1024 * 1024
    budget = int(vmem_cap * 0.7)

    param_bytes = int(wslab.size + brow.size + frow.size) * 4
    acc_bytes = nb * cpad * 128 * 4
    fixed = 2 * param_bytes + acc_bytes + 2 * nb * out_planes * 4 + (1 << 20)

    if hw_tile is None:
        per_lane = 2 * nb * c * esize                 # double-buffered x block
        t = max(512, ((budget - fixed) // max(per_lane, 1)) // 128 * 128)
        t = int(min(t, hw128, 8192))                  # 8192 bounds slab unroll
    else:
        t = int(min(max(128, _round_up(int(hw_tile), 128)), hw128))

    nk_hw = int(pl.cdiv(hw, t))
    needs_mask = (hw % t) != 0

    # Bound live vregs of the per-step partial sum: channel chunk such that
    # nb * cc * 128 f32 stays <= ~32 vregs.
    cc = min(c, max(8, (256 // max(nb, 1)) // 8 * 8))

    # No host-side pad / astype: x is read exactly once by the kernel DMAs.
    x_flat = x.reshape(n, c, hw)

    kernel = functools.partial(_rfb_kernel, c, cpad, out_planes, hw, t,
                               needs_mask, cc)

    n_stages = wslab.shape[0]
    cost = pl.CostEstimate(
        flops=int(2 * n_stages * n * d * d + n * c * hw),
        transcendentals=0,
        bytes_accessed=int(x_flat.size * esize + param_bytes
                           + n * out_planes * 4),
    )

    vmem_need = 2 * nb * c * t * esize + fixed
    vmem_limit = int(min(vmem_cap, max(32 * 1024 * 1024, vmem_need + (4 << 20))))

    def _call(single_buffer_params):
        pkw = dict(pipeline_mode=pl.Buffered(1)) if single_buffer_params else {}
        grid_spec = pltpu.PrefetchScalarGridSpec(
            num_scalar_prefetch=0,
            grid=(n_bb, nk_hw),
            in_specs=[
                pl.BlockSpec((nb, c, t), lambda b, k: (b, 0, k)),
                pl.BlockSpec(wslab.shape, lambda b, k: (0, 0, 0), **pkw),
                pl.BlockSpec(brow.shape, lambda b, k: (0, 0, 0), **pkw),
                pl.BlockSpec(frow.shape, lambda b, k: (0, 0, 0), **pkw),
            ],
            out_specs=pl.BlockSpec((1, nb, out_planes), lambda b, k: (b, 0, 0)),
            scratch_shapes=[pltpu.VMEM((nb, cpad, 128), jnp.float32)],
        )
        return pl.pallas_call(
            kernel,
            out_shape=jax.ShapeDtypeStruct((n_bb, nb, out_planes), jnp.float32),
            grid_spec=grid_spec,
            compiler_params=pltpu.CompilerParams(
                dimension_semantics=("parallel", "arbitrary"),
                vmem_limit_bytes=vmem_limit,
            ),
            cost_estimate=cost,
        )(x_flat, wslab, brow, frow)

    try:
        out = _call(True)           # params single-buffered (grid-invariant)
    except Exception:
        # Fallback if this JAX build rejects pl.Buffered(1) on inputs;
        # only VMEM use changes, never correctness.
        out = _call(False)

    return out.reshape(n, out_planes, 1, 1)


# ------------------------- Parameter construction -------------------------- #
def _make_basic_conv_params(key, cin, cout, ksize):
    """Kaiming-style conv weight + eval-mode BatchNorm folded to scale/bias."""
    kw, kg, kb, km, kv = jax.random.split(key, 5)
    fan_in = cin * ksize * ksize
    w_full = jax.random.normal(kw, (cout, cin, ksize, ksize), jnp.float32) * jnp.sqrt(
        2.0 / fan_in)
    # Only the center tap of a 3x3 kernel ever sees the single post-GAP pixel.
    w_eff = w_full[:, :, ksize // 2, ksize // 2]  # [cout, cin]
    gamma = 1.0 + 0.1 * jax.random.normal(kg, (cout,), jnp.float32)
    beta = 0.1 * jax.random.normal(kb, (cout,), jnp.float32)
    run_mean = 0.1 * jax.random.normal(km, (cout,), jnp.float32)
    run_var = 1.0 + jnp.abs(0.1 * jax.random.normal(kv, (cout,), jnp.float32))
    s = gamma / jnp.sqrt(run_var + 1e-5)
    b = beta - run_mean * s
    return (jnp.transpose(w_eff).astype(jnp.float32),   # [cin, cout]
            s.reshape(1, cout).astype(jnp.float32),
            b.reshape(1, cout).astype(jnp.float32))


def make_basic_rfb_params(key, in_planes, out_planes):
    inter = in_planes // 8
    conv_defs = [
        (in_planes, 2 * inter, 1),              # 0 branch0 conv1x1
        (2 * inter, 2 * inter, 3),              # 1 branch0 conv3x3
        (in_planes, inter, 1),                  # 2 branch1 conv1x1
        (inter, 2 * inter, 3),                  # 3 branch1 conv3x3
        (2 * inter, 2 * inter, 3),              # 4 branch1 conv3x3 dilated
        (in_planes, inter, 1),                  # 5 branch2 conv1x1
        (inter, inter // 2 * 3, 3),             # 6 branch2 conv3x3 #1
        (inter // 2 * 3, 2 * inter, 3),         # 7 branch2 conv3x3 #2
        (2 * inter, 2 * inter, 3),              # 8 branch2 conv3x3 dilated
        (6 * inter, out_planes, 1),             # 9 ConvLinear
        (in_planes, out_planes, 1),             # 10 shortcut
    ]
    keys = jax.random.split(key, len(conv_defs))
    return [_make_basic_conv_params(k, ci, co, ks)
            for k, (ci, co, ks) in zip(keys, conv_defs)]


def pack_basic_rfb_params(params, in_planes, out_planes, scale=0.1):
    """Pack 11 (w[cin,cout], bn_scale[1,cout], bn_bias[1,cout]) convs into 5
    block-diagonal stage matmuls: weights [5,D,D], bias [5,1,D], floor [5,1,D],
    with D a multiple of 128 (lane-dense MXU pushes, no in-kernel concat)."""
    # TODO(synk): per-stage [rows_s, cols_s] packing (instead of [5,D,D]) would
    # cut the slab ~2-4x for large D; negligible at these widths.
    i = in_planes // 8
    i2, i3 = 2 * i, (i // 2) * 3
    cin, cout = in_planes, out_planes
    widths = [4 * i + cout, 4 * i + i3 + cout, 6 * i + cout, 6 * i + cout, cout]
    d = _round_up(max(_round_up(cin, 8), *widths), 128)

    W = np.zeros((5, d, d), np.float32)
    B = np.zeros((5, 1, d), np.float32)
    F = np.full((5, 1, d), _NEG, np.float32)

    def put(stage, r0, c0, p, relu):
        w, s, b = (np.asarray(a, np.float32) for a in p)
        r1, c1 = r0 + w.shape[0], c0 + w.shape[1]
        W[stage, r0:r1, c0:c1] = w * s            # fold BN scale into weights
        B[stage, 0, c0:c1] = b[0]
        if relu:
            F[stage, 0, c0:c1] = 0.0

    def carry(stage, r0, c0, nch):                # identity carry, no relu
        W[stage, r0:r0 + nch, c0:c0 + nch] = np.eye(nch, dtype=np.float32)

    # stage 1: g -> [x0a(2i) | x1a(i) | x2a(i) | short(cout)]
    put(0, 0, 0,          params[0], True)
    put(0, 0, i2,         params[2], True)
    put(0, 0, 3 * i,      params[5], True)
    put(0, 0, 4 * i,      params[10], False)
    # stage 2: -> [x0(2i) | x1b(2i) | x2b(i3) | short]
    put(1, 0, 0,          params[1], False)
    put(1, i2, i2,        params[3], True)
    put(1, 3 * i, 4 * i,  params[6], True)
    carry(1, 4 * i, 4 * i + i3, cout)
    # stage 3: -> [x0 | x1(2i) | x2c(2i) | short]
    carry(2, 0, 0, i2)
    put(2, i2, i2,        params[4], False)
    put(2, 4 * i, 4 * i,  params[7], True)
    carry(2, 4 * i + i3, 6 * i, cout)
    # stage 4: -> [x0 | x1 | x2(2i) | short]
    carry(3, 0, 0, 4 * i)
    put(3, 4 * i, 4 * i,  params[8], False)
    carry(3, 6 * i, 6 * i, cout)
    # stage 5: out = relu(ConvLinear(cat(x0,x1,x2)) * scale + short)
    wl, sl, bl = (np.asarray(a, np.float32) for a in params[9])
    W[4, 0:6 * i, 0:cout] = wl * sl * scale
    W[4, 6 * i:6 * i + cout, 0:cout] = np.eye(cout, dtype=np.float32)
    B[4, 0, 0:cout] = bl[0] * scale
    F[4, 0, :] = 0.0                              # final ReLU

    return jnp.asarray(W), jnp.asarray(B), jnp.asarray(F)


# --------------------------- Pure-JAX reference ---------------------------- #
def basic_rfb_reference(x, params, scale=0.1):
    n, c, _, _ = x.shape
    g = x.reshape(n, c, -1).mean(-1)

    def bc(h, p, relu):
        w, s, b = p
        y = h @ (w * s) + b      # BN scale folded into weight (exact identity)
        return jnp.maximum(y, 0.0) if relu else y

    x0 = bc(bc(g, params[0], True), params[1], False)
    x1 = bc(bc(bc(g, params[2], True), params[3], True), params[4], False)
    x2 = bc(bc(bc(bc(g, params[5], True), params[6], True), params[7], True),
            params[8], False)
    cat = jnp.concatenate([x0, x1, x2], axis=-1)
    out = bc(cat, params[9], False)
    short = bc(g, params[10], False)
    out = jnp.maximum(out * scale + short, 0.0)
    return out.reshape(n, -1, 1, 1)


# --------------------------------- Main ------------------------------------ #
if __name__ == "__main__":
    key = jax.random.PRNGKey(0)
    kx, kp = jax.random.split(key)

    N, C_IN, H, W = 2, 32, 28, 28     # H*W = 784 (not tile aligned on purpose)
    C_OUT = 32
    SCALE = 0.1

    x = jax.random.normal(kx, (N, C_IN, H, W), jnp.float32)
    params = make_basic_rfb_params(kp, C_IN, C_OUT)
    wslab, brow, frow = pack_basic_rfb_params(params, C_IN, C_OUT, scale=SCALE)
    ref = basic_rfb_reference(x, params, scale=SCALE)

    # hw_tile=512 -> 2 grid steps over H*W: exercises pipelined GAP accumulation,
    # the pl.when init/finalize paths and the in-kernel spatial-tail mask.
    out = basic_rfb_forward(x, wslab, brow, frow, C_OUT, hw_tile=512)
    out = jax.block_until_ready(out)
    assert out.shape == (N, C_OUT, 1, 1), out.shape
    err = float(jnp.max(jnp.abs(out - ref)))
    assert jnp.allclose(out, ref, rtol=1e-4, atol=1e-4), err

    # Auto tile (>=512 floor, VMEM-budget aware) -> single masked step here.
    out2 = jax.block_until_ready(basic_rfb_forward(x, wslab, brow, frow, C_OUT))
    err2 = float(jnp.max(jnp.abs(out2 - ref)))
    assert jnp.allclose(out2, ref, rtol=1e-4, atol=1e-4), err2

    # bf16-streamed x (v5e HBM-bandwidth path): f32 accumulation in-kernel,
    # loose tolerance only for the bf16 input rounding.
    out_bf = jax.block_until_ready(
        basic_rfb_forward(x.astype(jnp.bfloat16), wslab, brow, frow, C_OUT,
                          hw_tile=512))
    err_bf = float(jnp.max(jnp.abs(out_bf - ref)))
    assert jnp.allclose(out_bf, ref, rtol=1e-1, atol=1e-1), err_bf

    print("KERNEL_OK")
</pallas_src>

<mosaic_0001>
module attributes {stable_mosaic.version = 11 : i64} {
  func.func @_rfb_kernel(%arg0: i32, %arg1: i32, %arg2: memref<1x32x512xf32, #tpu.memory_space<vmem>>, %arg3: memref<5x128x128xf32, #tpu.memory_space<vmem>>, %arg4: memref<5x1x128xf32, #tpu.memory_space<vmem>>, %arg5: memref<5x1x128xf32, #tpu.memory_space<vmem>>, %arg6: memref<1x1x32xf32, #tpu.memory_space<vmem>>, %arg7: memref<1x32x128xf32, #tpu.memory_space<vmem>>) attributes {dimension_semantics = [#tpu.dimension_semantics<parallel>, #tpu.dimension_semantics<arbitrary>], iteration_bounds = array<i64: 2, 2>, scalar_prefetch = 0 : i64, scratch_operands = 1 : i64, tpu.core_type = #tpu.core_type<tc>, window_params = [{transform_indices = @transform_0, window_bounds = array<i64: 1, 32, 512>}, {pipeline_mode = #tpu.pipeline_mode<synchronous>, transform_indices = @transform_1, window_bounds = array<i64: 5, 128, 128>}, {pipeline_mode = #tpu.pipeline_mode<synchronous>, transform_indices = @transform_2, window_bounds = array<i64: 5, 1, 128>}, {pipeline_mode = #tpu.pipeline_mode<synchronous>, transform_indices = @transform_3, window_bounds = array<i64: 5, 1, 128>}, {transform_indices = @transform_4, window_bounds = array<i64: 1, 1, 32>}]} {
    %c0_i32 = arith.constant 0 : i32
    %0 = arith.cmpi eq, %arg1, %c0_i32 : i32
    %1 = arith.extui %0 : i1 to i32
    %c0_i32_0 = arith.constant 0 : i32
    %2 = arith.cmpi ne, %1, %c0_i32_0 : i32
    scf.if %2 {
      %cst = arith.constant 0.000000e+00 : f32
      %12 = vector.broadcast %cst : f32 to vector<1x32x128xf32>
      %c0 = arith.constant 0 : index
      %c0_6 = arith.constant 0 : index
      %c0_7 = arith.constant 0 : index
      %13 = vector.load %arg7[%c0, %c0_6, %c0_7] : memref<1x32x128xf32, #tpu.memory_space<vmem>>, vector<1x32x128xf32>
      tpu.vector_store %arg7[%c0, %c0_6, %c0_7], %12 {strides = array<i32>} : memref<1x32x128xf32, #tpu.memory_space<vmem>>, vector<1x32x128xf32>,
    } else {
    }
    %c1_i32 = arith.constant 1 : i32
    %3 = arith.cmpi eq, %arg1, %c1_i32 : i32
    %4 = arith.extui %3 : i1 to i32
    %c0_i32_1 = arith.constant 0 : i32
    %5 = arith.cmpi ne, %4, %c0_i32_1 : i32
    scf.if %5 {
      %c0 = arith.constant 0 : index
      %c0_6 = arith.constant 0 : index
      %c0_7 = arith.constant 0 : index
      %12 = vector.load %arg2[%c0, %c0_6, %c0_7] : memref<1x32x512xf32, #tpu.memory_space<vmem>>, vector<1x32x128xf32>
      %13 = tpu.iota {dimensions = array<i32: 2>} : vector<1x32x128xi32>
      %c512_i32 = arith.constant 512 : i32
      %14 = arith.muli %arg1, %c512_i32 : i32
      %c0_i32_8 = arith.constant 0 : i32
      %15 = arith.addi %14, %c0_i32_8 : i32
      %16 = vector.broadcast %15 : i32 to vector<1x32x128xi32>
      %17 = arith.addi %16, %13 : vector<1x32x128xi32>
      %c784_i32 = arith.constant 784 : i32
      %18 = vector.broadcast %c784_i32 : i32 to vector<1x32x128xi32>
      %19 = arith.cmpi slt, %17, %18 : vector<1x32x128xi32>
      %cst = arith.constant 0.000000e+00 : f32
      %20 = vector.broadcast %cst : f32 to vector<1x32x128xf32>
      %21 = arith.select %19, %12, %20 : vector<1x32x128xi1>, vector<1x32x128xf32>
      %c0_9 = arith.constant 0 : index
      %c0_10 = arith.constant 0 : index
      %c128 = arith.constant 128 : index
      %22 = vector.load %arg2[%c0_9, %c0_10, %c128] : memref<1x32x512xf32, #tpu.memory_space<vmem>>, vector<1x32x128xf32>
      %23 = tpu.iota {dimensions = array<i32: 2>} : vector<1x32x128xi32>
      %c512_i32_11 = arith.constant 512 : i32
      %24 = arith.muli %arg1, %c512_i32_11 : i32
      %c128_i32 = arith.constant 128 : i32
      %25 = arith.addi %24, %c128_i32 : i32
      %26 = vector.broadcast %25 : i32 to vector<1x32x128xi32>
      %27 = arith.addi %26, %23 : vector<1x32x128xi32>
      %c784_i32_12 = arith.constant 784 : i32
      %28 = vector.broadcast %c784_i32_12 : i32 to vector<1x32x128xi32>
      %29 = arith.cmpi slt, %27, %28 : vector<1x32x128xi32>
      %cst_13 = arith.constant 0.000000e+00 : f32
      %30 = vector.broadcast %cst_13 : f32 to vector<1x32x128xf32>
      %31 = arith.select %29, %22, %30 : vector<1x32x128xi1>, vector<1x32x128xf32>
      %32 = arith.addf %21, %31 : vector<1x32x128xf32>
      %c0_14 = arith.constant 0 : index
      %c0_15 = arith.constant 0 : index
      %c256 = arith.constant 256 : index
      %33 = vector.load %arg2[%c0_14, %c0_15, %c256] : memref<1x32x512xf32, #tpu.memory_space<vmem>>, vector<1x32x128xf32>
      %34 = tpu.iota {dimensions = array<i32: 2>} : vector<1x32x128xi32>
      %c512_i32_16 = arith.constant 512 : i32
      %35 = arith.muli %arg1, %c512_i32_16 : i32
      %c256_i32 = arith.constant 256 : i32
      %36 = arith.addi %35, %c256_i32 : i32
      %37 = vector.broadcast %36 : i32 to vector<1x32x128xi32>
      %38 = arith.addi %37, %34 : vector<1x32x128xi32>
      %c784_i32_17 = arith.constant 784 : i32
      %39 = vector.broadcast %c784_i32_17 : i32 to vector<1x32x128xi32>
      %40 = arith.cmpi slt, %38, %39 : vector<1x32x128xi32>
      %cst_18 = arith.constant 0.000000e+00 : f32
      %41 = vector.broadcast %cst_18 : f32 to vector<1x32x128xf32>
      %42 = arith.select %40, %33, %41 : vector<1x32x128xi1>, vector<1x32x128xf32>
      %43 = arith.addf %32, %42 : vector<1x32x128xf32>
      %c0_19 = arith.constant 0 : index
      %c0_20 = arith.constant 0 : index
      %c384 = arith.constant 384 : index
      %44 = vector.load %arg2[%c0_19, %c0_20, %c384] : memref<1x32x512xf32, #tpu.memory_space<vmem>>, vector<1x32x128xf32>
      %45 = tpu.iota {dimensions = array<i32: 2>} : vector<1x32x128xi32>
      %c512_i32_21 = arith.constant 512 : i32
      %46 = arith.muli %arg1, %c512_i32_21 : i32
      %c384_i32 = arith.constant 384 : i32
      %47 = arith.addi %46, %c384_i32 : i32
      %48 = vector.broadcast %47 : i32 to vector<1x32x128xi32>
      %49 = arith.addi %48, %45 : vector<1x32x128xi32>
      %c784_i32_22 = arith.constant 784 : i32
      %50 = vector.broadcast %c784_i32_22 : i32 to vector<1x32x128xi32>
      %51 = arith.cmpi slt, %49, %50 : vector<1x32x128xi32>
      %cst_23 = arith.constant 0.000000e+00 : f32
      %52 = vector.broadcast %cst_23 : f32 to vector<1x32x128xf32>
      %53 = arith.select %51, %44, %52 : vector<1x32x128xi1>, vector<1x32x128xf32>
      %54 = arith.addf %43, %53 : vector<1x32x128xf32>
      %c0_24 = arith.constant 0 : index
      %c0_25 = arith.constant 0 : index
      %c0_26 = arith.constant 0 : index
      %55 = vector.load %arg7[%c0_24, %c0_25, %c0_26] : memref<1x32x128xf32, #tpu.memory_space<vmem>>, vector<1x32x128xf32>
      %56 = arith.addf %55, %54 : vector<1x32x128xf32>
      %c0_27 = arith.constant 0 : index
      %c0_28 = arith.constant 0 : index
      %c0_29 = arith.constant 0 : index
      %57 = vector.load %arg7[%c0_27, %c0_28, %c0_29] : memref<1x32x128xf32, #tpu.memory_space<vmem>>, vector<1x32x128xf32>
      tpu.vector_store %arg7[%c0_27, %c0_28, %c0_29], %56 {strides = array<i32>} : memref<1x32x128xf32, #tpu.memory_space<vmem>>, vector<1x32x128xf32>,
    } else {
    }
    %c1_i32_2 = arith.constant 1 : i32
    %6 = arith.cmpi ne, %arg1, %c1_i32_2 : i32
    %7 = arith.extui %6 : i1 to i32
    %c0_i32_3 = arith.constant 0 : i32
    %8 = arith.cmpi ne, %7, %c0_i32_3 : i32
    scf.if %8 {
      %c0 = arith.constant 0 : index
      %c0_6 = arith.constant 0 : index
      %c0_7 = arith.constant 0 : index
      %12 = vector.load %arg2[%c0, %c0_6, %c0_7] : memref<1x32x512xf32, #tpu.memory_space<vmem>>, vector<1x32x128xf32>
      %c0_8 = arith.constant 0 : index
      %c0_9 = arith.constant 0 : index
      %c128 = arith.constant 128 : index
      %13 = vector.load %arg2[%c0_8, %c0_9, %c128] : memref<1x32x512xf32, #tpu.memory_space<vmem>>, vector<1x32x128xf32>
      %14 = arith.addf %12, %13 : vector<1x32x128xf32>
      %c0_10 = arith.constant 0 : index
      %c0_11 = arith.constant 0 : index
      %c256 = arith.constant 256 : index
      %15 = vector.load %arg2[%c0_10, %c0_11, %c256] : memref<1x32x512xf32, #tpu.memory_space<vmem>>, vector<1x32x128xf32>
      %16 = arith.addf %14, %15 : vector<1x32x128xf32>
      %c0_12 = arith.constant 0 : index
      %c0_13 = arith.constant 0 : index
      %c384 = arith.constant 384 : index
      %17 = vector.load %arg2[%c0_12, %c0_13, %c384] : memref<1x32x512xf32, #tpu.memory_space<vmem>>, vector<1x32x128xf32>
      %18 = arith.addf %16, %17 : vector<1x32x128xf32>
      %c0_14 = arith.constant 0 : index
      %c0_15 = arith.constant 0 : index
      %c0_16 = arith.constant 0 : index
      %19 = vector.load %arg7[%c0_14, %c0_15, %c0_16] : memref<1x32x128xf32, #tpu.memory_space<vmem>>, vector<1x32x128xf32>
      %20 = arith.addf %19, %18 : vector<1x32x128xf32>
      %c0_17 = arith.constant 0 : index
      %c0_18 = arith.constant 0 : index
      %c0_19 = arith.constant 0 : index
      %21 = vector.load %arg7[%c0_17, %c0_18, %c0_19] : memref<1x32x128xf32, #tpu.memory_space<vmem>>, vector<1x32x128xf32>
      tpu.vector_store %arg7[%c0_17, %c0_18, %c0_19], %20 {strides = array<i32>} : memref<1x32x128xf32, #tpu.memory_space<vmem>>, vector<1x32x128xf32>,
    } else {
    }
    %c1_i32_4 = arith.constant 1 : i32
    %9 = arith.cmpi eq, %arg1, %c1_i32_4 : i32
    %10 = arith.extui %9 : i1 to i32
    %c0_i32_5 = arith.constant 0 : i32
    %11 = arith.cmpi ne, %10, %c0_i32_5 : i32
    scf.if %11 {
      %c0 = arith.constant 0 : index
      %c0_6 = arith.constant 0 : index
      %c0_7 = arith.constant 0 : index
      %12 = vector.load %arg7[%c0, %c0_6, %c0_7] : memref<1x32x128xf32, #tpu.memory_space<vmem>>, vector<1x32x128xf32>
      %cst = arith.constant dense<0.000000e+00> : vector<1x32xf32>
      %13 = vector.multi_reduction <add>, %12, %cst [2] : vector<1x32x128xf32> to vector<1x32xf32>
      %cst_8 = arith.constant 0.00127551018 : f32
      %14 = vector.broadcast %cst_8 : f32 to vector<1x32xf32>
      %15 = arith.mulf %13, %14 : vector<1x32xf32>
      %c0_9 = arith.constant 0 : index
      %c0_10 = arith.constant 0 : index
      %c0_11 = arith.constant 0 : index
      %16 = vector.load %arg3[%c0_9, %c0_10, %c0_11] : memref<5x128x128xf32, #tpu.memory_space<vmem>>, vector<1x32x128xf32>
      %17 = vector.shape_cast %16 : vector<1x32x128xf32> to vector<32x128xf32>
      %cst_12 = arith.constant dense<0.000000e+00> : vector<1x128xf32>
      %18 = tpu.matmul %15, %17, %cst_12 {dimension_numbers = #tpu.dot_dimension_numbers<[1], [0], [0], [1], [0, 0, 1, 1], [], []>} : vector<1x32xf32>, vector<32x128xf32>, vector<1x128xf32> -> vector<1x128xf32>
      %c0_13 = arith.constant 0 : index
      %c0_14 = arith.constant 0 : index
      %c0_15 = arith.constant 0 : index
      %19 = vector.load %arg4[%c0_13, %c0_14, %c0_15] : memref<5x1x128xf32, #tpu.memory_space<vmem>>, vector<1x1x128xf32>
      %20 = vector.shape_cast %19 : vector<1x1x128xf32> to vector<1x128xf32>
      %21 = arith.addf %18, %20 : vector<1x128xf32>
      %c0_16 = arith.constant 0 : index
      %c0_17 = arith.constant 0 : index
      %c0_18 = arith.constant 0 : index
      %22 = vector.load %arg5[%c0_16, %c0_17, %c0_18] : memref<5x1x128xf32, #tpu.memory_space<vmem>>, vector<1x1x128xf32>
      %23 = vector.shape_cast %22 : vector<1x1x128xf32> to vector<1x128xf32>
      %24 = arith.maximumf %21, %23 : vector<1x128xf32>
      %c1 = arith.constant 1 : index
      %c0_19 = arith.constant 0 : index
      %c0_20 = arith.constant 0 : index
      %25 = vector.load %arg3[%c1, %c0_19, %c0_20] : memref<5x128x128xf32, #tpu.memory_space<vmem>>, vector<1x128x128xf32>
      %26 = vector.shape_cast %25 : vector<1x128x128xf32> to vector<128x128xf32>
      %cst_21 = arith.constant dense<0.000000e+00> : vector<1x128xf32>
      %27 = tpu.matmul %24, %26, %cst_21 {dimension_numbers = #tpu.dot_dimension_numbers<[1], [0], [0], [1], [0, 0, 1, 1], [], []>} : vector<1x128xf32>, vector<128x128xf32>, vector<1x128xf32> -> vector<1x128xf32>
      %c1_22 = arith.constant 1 : index
      %c0_23 = arith.constant 0 : index
      %c0_24 = arith.constant 0 : index
      %28 = vector.load %arg4[%c1_22, %c0_23, %c0_24] : memref<5x1x128xf32, #tpu.memory_space<vmem>>, vector<1x1x128xf32>
      %29 = vector.shape_cast %28 : vector<1x1x128xf32> to vector<1x128xf32>
      %30 = arith.addf %27, %29 : vector<1x128xf32>
      %c1_25 = arith.constant 1 : index
      %c0_26 = arith.constant 0 : index
      %c0_27 = arith.constant 0 : index
      %31 = vector.load %arg5[%c1_25, %c0_26, %c0_27] : memref<5x1x128xf32, #tpu.memory_space<vmem>>, vector<1x1x128xf32>
      %32 = vector.shape_cast %31 : vector<1x1x128xf32> to vector<1x128xf32>
      %33 = arith.maximumf %30, %32 : vector<1x128xf32>
      %c2 = arith.constant 2 : index
      %c0_28 = arith.constant 0 : index
      %c0_29 = arith.constant 0 : index
      %34 = vector.load %arg3[%c2, %c0_28, %c0_29] : memref<5x128x128xf32, #tpu.memory_space<vmem>>, vector<1x128x128xf32>
      %35 = vector.shape_cast %34 : vector<1x128x128xf32> to vector<128x128xf32>
      %cst_30 = arith.constant dense<0.000000e+00> : vector<1x128xf32>
      %36 = tpu.matmul %33, %35, %cst_30 {dimension_numbers = #tpu.dot_dimension_numbers<[1], [0], [0], [1], [0, 0, 1, 1], [], []>} : vector<1x128xf32>, vector<128x128xf32>, vector<1x128xf32> -> vector<1x128xf32>
      %c2_31 = arith.constant 2 : index
      %c0_32 = arith.constant 0 : index
      %c0_33 = arith.constant 0 : index
      %37 = vector.load %arg4[%c2_31, %c0_32, %c0_33] : memref<5x1x128xf32, #tpu.memory_space<vmem>>, vector<1x1x128xf32>
      %38 = vector.shape_cast %37 : vector<1x1x128xf32> to vector<1x128xf32>
      %39 = arith.addf %36, %38 : vector<1x128xf32>
      %c2_34 = arith.constant 2 : index
      %c0_35 = arith.constant 0 : index
      %c0_36 = arith.constant 0 : index
      %40 = vector.load %arg5[%c2_34, %c0_35, %c0_36] : memref<5x1x128xf32, #tpu.memory_space<vmem>>, vector<1x1x128xf32>
      %41 = vector.shape_cast %40 : vector<1x1x128xf32> to vector<1x128xf32>
      %42 = arith.maximumf %39, %41 : vector<1x128xf32>
      %c3 = arith.constant 3 : index
      %c0_37 = arith.constant 0 : index
      %c0_38 = arith.constant 0 : index
      %43 = vector.load %arg3[%c3, %c0_37, %c0_38] : memref<5x128x128xf32, #tpu.memory_space<vmem>>, vector<1x128x128xf32>
      %44 = vector.shape_cast %43 : vector<1x128x128xf32> to vector<128x128xf32>
      %cst_39 = arith.constant dense<0.000000e+00> : vector<1x128xf32>
      %45 = tpu.matmul %42, %44, %cst_39 {dimension_numbers = #tpu.dot_dimension_numbers<[1], [0], [0], [1], [0, 0, 1, 1], [], []>} : vector<1x128xf32>, vector<128x128xf32>, vector<1x128xf32> -> vector<1x128xf32>
      %c3_40 = arith.constant 3 : index
      %c0_41 = arith.constant 0 : index
      %c0_42 = arith.constant 0 : index
      %46 = vector.load %arg4[%c3_40, %c0_41, %c0_42] : memref<5x1x128xf32, #tpu.memory_space<vmem>>, vector<1x1x128xf32>
      %47 = vector.shape_cast %46 : vector<1x1x128xf32> to vector<1x128xf32>
      %48 = arith.addf %45, %47 : vector<1x128xf32>
      %c3_43 = arith.constant 3 : index
      %c0_44 = arith.constant 0 : index
      %c0_45 = arith.constant 0 : index
      %49 = vector.load %arg5[%c3_43, %c0_44, %c0_45] : memref<5x1x128xf32, #tpu.memory_space<vmem>>, vector<1x1x128xf32>
      %50 = vector.shape_cast %49 : vector<1x1x128xf32> to vector<1x128xf32>
      %51 = arith.maximumf %48, %50 : vector<1x128xf32>
      %c4 = arith.constant 4 : index
      %c0_46 = arith.constant 0 : index
      %c0_47 = arith.constant 0 : index
      %52 = vector.load %arg3[%c4, %c0_46, %c0_47] : memref<5x128x128xf32, #tpu.memory_space<vmem>>, vector<1x128x128xf32>
      %53 = vector.shape_cast %52 : vector<1x128x128xf32> to vector<128x128xf32>
      %cst_48 = arith.constant dense<0.000000e+00> : vector<1x128xf32>
      %54 = tpu.matmul %51, %53, %cst_48 {dimension_numbers = #tpu.dot_dimension_numbers<[1], [0], [0], [1], [0, 0, 1, 1], [], []>} : vector<1x128xf32>, vector<128x128xf32>, vector<1x128xf32> -> vector<1x128xf32>
      %c4_49 = arith.constant 4 : index
      %c0_50 = arith.constant 0 : index
      %c0_51 = arith.constant 0 : index
      %55 = vector.load %arg4[%c4_49, %c0_50, %c0_51] : memref<5x1x128xf32, #tpu.memory_space<vmem>>, vector<1x1x128xf32>
      %56 = vector.shape_cast %55 : vector<1x1x128xf32> to vector<1x128xf32>
      %57 = arith.addf %54, %56 : vector<1x128xf32>
      %c4_52 = arith.constant 4 : index
      %c0_53 = arith.constant 0 : index
      %c0_54 = arith.constant 0 : index
      %58 = vector.load %arg5[%c4_52, %c0_53, %c0_54] : memref<5x1x128xf32, #tpu.memory_space<vmem>>, vector<1x1x128xf32>
      %59 = vector.shape_cast %58 : vector<1x1x128xf32> to vector<1x128xf32>
      %60 = arith.maximumf %57, %59 : vector<1x128xf32>
      %61 = vector.extract_strided_slice %60 {offsets = [0, 0], sizes = [1, 32], strides = [1, 1]} : vector<1x128xf32> to vector<1x32xf32>
      %62 = vector.shape_cast %61 : vector<1x32xf32> to vector<1x1x32xf32>
      %c0_55 = arith.constant 0 : index
      %c0_56 = arith.constant 0 : index
      %c0_57 = arith.constant 0 : index
      %63 = vector.load %arg6[%c0_55, %c0_56, %c0_57] : memref<1x1x32xf32, #tpu.memory_space<vmem>>, vector<1x1x32xf32>
      tpu.vector_store %arg6[%c0_55, %c0_56, %c0_57], %62 {strides = array<i32>} : memref<1x1x32xf32, #tpu.memory_space<vmem>>, vector<1x1x32xf32>,
    } else {
    }
    return
  }
  func.func @transform_0(%arg0: i32, %arg1: i32) -> (i32, i32, i32) {
    %c0_i32 = arith.constant 0 : i32
    %c0_i32_0 = arith.constant 0 : i32
    return %arg0, %c0_i32, %arg1 : i32, i32, i32
  }
  func.func @transform_1(%arg0: i32, %arg1: i32) -> (i32, i32, i32) {
    %c0_i32 = arith.constant 0 : i32
    %c0_i32_0 = arith.constant 0 : i32
    %c0_i32_1 = arith.constant 0 : i32
    %c0_i32_2 = arith.constant 0 : i32
    return %c0_i32, %c0_i32_0, %c0_i32_1 : i32, i32, i32
  }
  func.func @transform_2(%arg0: i32, %arg1: i32) -> (i32, i32, i32) {
    %c0_i32 = arith.constant 0 : i32
    %c0_i32_0 = arith.constant 0 : i32
    %c0_i32_1 = arith.constant 0 : i32
    %c0_i32_2 = arith.constant 0 : i32
    return %c0_i32, %c0_i32_0, %c0_i32_1 : i32, i32, i32
  }
  func.func @transform_3(%arg0: i32, %arg1: i32) -> (i32, i32, i32) {
    %c0_i32 = arith.constant 0 : i32
    %c0_i32_0 = arith.constant 0 : i32
    %c0_i32_1 = arith.constant 0 : i32
    %c0_i32_2 = arith.constant 0 : i32
    return %c0_i32, %c0_i32_0, %c0_i32_1 : i32, i32, i32
  }
  func.func @transform_4(%arg0: i32, %arg1: i32) -> (i32, i32, i32) {
    %c0_i32 = arith.constant 0 : i32
    %c0_i32_0 = arith.constant 0 : i32
    %c0_i32_1 = arith.constant 0 : i32
    return %arg0, %c0_i32, %c0_i32_0 : i32, i32, i32
  }
}

module attributes {stable_mosaic.version = 11 : i64} {
  func.func @_rfb_kernel(%arg0: i32, %arg1: i32, %arg2: memref<1x32x512xf32, #tpu.memory_space<vmem>>, %arg3: memref<5x128x128xf32, #tpu.memory_space<vmem>>, %arg4: memref<5x1x128xf32, #tpu.memory_space<vmem>>, %arg5: memref<5x1x128xf32, #tpu.memory_space<vmem>>, %arg6: memref<1x1x32xf32, #tpu.memory_space<vmem>>, %arg7: memref<1x32x128xf32, #tpu.memory_space<vmem>>) attributes {dimension_semantics = [#tpu.dimension_semantics<parallel>, #tpu.dimension_semantics<arbitrary>], iteration_bounds = array<i64: 2, 2>, scalar_prefetch = 0 : i64, scratch_operands = 1 : i64, tpu.core_type = #tpu.core_type<tc>, window_params = [{transform_indices = @transform_0, window_bounds = array<i64: 1, 32, 512>}, {pipeline_mode = #tpu.pipeline_mode<synchronous>, transform_indices = @transform_1, window_bounds = array<i64: 5, 128, 128>}, {pipeline_mode = #tpu.pipeline_mode<synchronous>, transform_indices = @transform_2, window_bounds = array<i64: 5, 1, 128>}, {pipeline_mode = #tpu.pipeline_mode<synchronous>, transform_indices = @transform_3, window_bounds = array<i64: 5, 1, 128>}, {transform_indices = @transform_4, window_bounds = array<i64: 1, 1, 32>}]} {
    %c0_i32 = arith.constant 0 : i32
    %0 = arith.cmpi eq, %arg1, %c0_i32 : i32
    %1 = arith.extui %0 : i1 to i32
    %c0_i32_0 = arith.constant 0 : i32
    %2 = arith.cmpi ne, %1, %c0_i32_0 : i32
    scf.if %2 {
      %cst = arith.constant 0.000000e+00 : f32
      %12 = vector.broadcast %cst : f32 to vector<1x32x128xf32>
      %c0 = arith.constant 0 : index
      %c0_6 = arith.constant 0 : index
      %c0_7 = arith.constant 0 : index
      %13 = vector.load %arg7[%c0, %c0_6, %c0_7] : memref<1x32x128xf32, #tpu.memory_space<vmem>>, vector<1x32x128xf32>
      tpu.vector_store %arg7[%c0, %c0_6, %c0_7], %12 {strides = array<i32>} : memref<1x32x128xf32, #tpu.memory_space<vmem>>, vector<1x32x128xf32>,
    } else {
    }
    %c1_i32 = arith.constant 1 : i32
    %3 = arith.cmpi eq, %arg1, %c1_i32 : i32
    %4 = arith.extui %3 : i1 to i32
    %c0_i32_1 = arith.constant 0 : i32
    %5 = arith.cmpi ne, %4, %c0_i32_1 : i32
    scf.if %5 {
      %c0 = arith.constant 0 : index
      %c0_6 = arith.constant 0 : index
      %c0_7 = arith.constant 0 : index
      %12 = vector.load %arg2[%c0, %c0_6, %c0_7] : memref<1x32x512xf32, #tpu.memory_space<vmem>>, vector<1x32x128xf32>
      %13 = tpu.iota {dimensions = array<i32: 2>} : vector<1x32x128xi32>
      %c512_i32 = arith.constant 512 : i32
      %14 = arith.muli %arg1, %c512_i32 : i32
      %c0_i32_8 = arith.constant 0 : i32
      %15 = arith.addi %14, %c0_i32_8 : i32
      %16 = vector.broadcast %15 : i32 to vector<1x32x128xi32>
      %17 = arith.addi %16, %13 : vector<1x32x128xi32>
      %c784_i32 = arith.constant 784 : i32
      %18 = vector.broadcast %c784_i32 : i32 to vector<1x32x128xi32>
      %19 = arith.cmpi slt, %17, %18 : vector<1x32x128xi32>
      %cst = arith.constant 0.000000e+00 : f32
      %20 = vector.broadcast %cst : f32 to vector<1x32x128xf32>
      %21 = arith.select %19, %12, %20 : vector<1x32x128xi1>, vector<1x32x128xf32>
      %c0_9 = arith.constant 0 : index
      %c0_10 = arith.constant 0 : index
      %c128 = arith.constant 128 : index
      %22 = vector.load %arg2[%c0_9, %c0_10, %c128] : memref<1x32x512xf32, #tpu.memory_space<vmem>>, vector<1x32x128xf32>
      %23 = tpu.iota {dimensions = array<i32: 2>} : vector<1x32x128xi32>
      %c512_i32_11 = arith.constant 512 : i32
      %24 = arith.muli %arg1, %c512_i32_11 : i32
      %c128_i32 = arith.constant 128 : i32
      %25 = arith.addi %24, %c128_i32 : i32
      %26 = vector.broadcast %25 : i32 to vector<1x32x128xi32>
      %27 = arith.addi %26, %23 : vector<1x32x128xi32>
      %c784_i32_12 = arith.constant 784 : i32
      %28 = vector.broadcast %c784_i32_12 : i32 to vector<1x32x128xi32>
      %29 = arith.cmpi slt, %27, %28 : vector<1x32x128xi32>
      %cst_13 = arith.constant 0.000000e+00 : f32
      %30 = vector.broadcast %cst_13 : f32 to vector<1x32x128xf32>
      %31 = arith.select %29, %22, %30 : vector<1x32x128xi1>, vector<1x32x128xf32>
      %32 = arith.addf %21, %31 : vector<1x32x128xf32>
      %c0_14 = arith.constant 0 : index
      %c0_15 = arith.constant 0 : index
      %c256 = arith.constant 256 : index
      %33 = vector.load %arg2[%c0_14, %c0_15, %c256] : memref<1x32x512xf32, #tpu.memory_space<vmem>>, vector<1x32x128xf32>
      %34 = tpu.iota {dimensions = array<i32: 2>} : vector<1x32x128xi32>
      %c512_i32_16 = arith.constant 512 : i32
      %35 = arith.muli %arg1, %c512_i32_16 : i32
      %c256_i32 = arith.constant 256 : i32
      %36 = arith.addi %35, %c256_i32 : i32
      %37 = vector.broadcast %36 : i32 to vector<1x32x128xi32>
      %38 = arith.addi %37, %34 : vector<1x32x128xi32>
      %c784_i32_17 = arith.constant 784 : i32
      %39 = vector.broadcast %c784_i32_17 : i32 to vector<1x32x128xi32>
      %40 = arith.cmpi slt, %38, %39 : vector<1x32x128xi32>
      %cst_18 = arith.constant 0.000000e+00 : f32
      %41 = vector.broadcast %cst_18 : f32 to vector<1x32x128xf32>
      %42 = arith.select %40, %33, %41 : vector<1x32x128xi1>, vector<1x32x128xf32>
      %43 = arith.addf %32, %42 : vector<1x32x128xf32>
      %c0_19 = arith.constant 0 : index
      %c0_20 = arith.constant 0 : index
      %c384 = arith.constant 384 : index
      %44 = vector.load %arg2[%c0_19, %c0_20, %c384] : memref<1x32x512xf32, #tpu.memory_space<vmem>>, vector<1x32x128xf32>
      %45 = tpu.iota {dimensions = array<i32: 2>} : vector<1x32x128xi32>
      %c512_i32_21 = arith.constant 512 : i32
      %46 = arith.muli %arg1, %c512_i32_21 : i32
      %c384_i32 = arith.constant 384 : i32
      %47 = arith.addi %46, %c384_i32 : i32
      %48 = vector.broadcast %47 : i32 to vector<1x32x128xi32>
      %49 = arith.addi %48, %45 : vector<1x32x128xi32>
      %c784_i32_22 = arith.constant 784 : i32
      %50 = vector.broadcast %c784_i32_22 : i32 to vector<1x32x128xi32>
      %51 = arith.cmpi slt, %49, %50 : vector<1x32x128xi32>
      %cst_23 = arith.constant 0.000000e+00 : f32
      %52 = vector.broadcast %cst_23 : f32 to vector<1x32x128xf32>
      %53 = arith.select %51, %44, %52 : vector<1x32x128xi1>, vector<1x32x128xf32>
      %54 = arith.addf %43, %53 : vector<1x32x128xf32>
      %c0_24 = arith.constant 0 : index
      %c0_25 = arith.constant 0 : index
      %c0_26 = arith.constant 0 : index
      %55 = vector.load %arg7[%c0_24, %c0_25, %c0_26] : memref<1x32x128xf32, #tpu.memory_space<vmem>>, vector<1x32x128xf32>
      %56 = arith.addf %55, %54 : vector<1x32x128xf32>
      %c0_27 = arith.constant 0 : index
      %c0_28 = arith.constant 0 : index
      %c0_29 = arith.constant 0 : index
      %57 = vector.load %arg7[%c0_27, %c0_28, %c0_29] : memref<1x32x128xf32, #tpu.memory_space<vmem>>, vector<1x32x128xf32>
      tpu.vector_store %arg7[%c0_27, %c0_28, %c0_29], %56 {strides = array<i32>} : memref<1x32x128xf32, #tpu.memory_space<vmem>>, vector<1x32x128xf32>,
    } else {
    }
    %c1_i32_2 = arith.constant 1 : i32
    %6 = arith.cmpi ne, %arg1, %c1_i32_2 : i32
    %7 = arith.extui %6 : i1 to i32
    %c0_i32_3 = arith.constant 0 : i32
    %8 = arith.cmpi ne, %7, %c0_i32_3 : i32
    scf.if %8 {
      %c0 = arith.constant 0 : index
      %c0_6 = arith.constant 0 : index
      %c0_7 = arith.constant 0 : index
      %12 = vector.load %arg2[%c0, %c0_6, %c0_7] : memref<1x32x512xf32, #tpu.memory_space<vmem>>, vector<1x32x128xf32>
      %c0_8 = arith.constant 0 : index
      %c0_9 = arith.constant 0 : index
      %c128 = arith.constant 128 : index
      %13 = vector.load %arg2[%c0_8, %c0_9, %c128] : memref<1x32x512xf32, #tpu.memory_space<vmem>>, vector<1x32x128xf32>
      %14 = arith.addf %12, %13 : vector<1x32x128xf32>
      %c0_10 = arith.constant 0 : index
      %c0_11 = arith.constant 0 : index
      %c256 = arith.constant 256 : index
      %15 = vector.load %arg2[%c0_10, %c0_11, %c256] : memref<1x32x512xf32, #tpu.memory_space<vmem>>, vector<1x32x128xf32>
      %16 = arith.addf %14, %15 : vector<1x32x128xf32>
      %c0_12 = arith.constant 0 : index
      %c0_13 = arith.constant 0 : index
      %c384 = arith.constant 384 : index
      %17 = vector.load %arg2[%c0_12, %c0_13, %c384] : memref<1x32x512xf32, #tpu.memory_space<vmem>>, vector<1x32x128xf32>
      %18 = arith.addf %16, %17 : vector<1x32x128xf32>
      %c0_14 = arith.constant 0 : index
      %c0_15 = arith.constant 0 : index
      %c0_16 = arith.constant 0 : index
      %19 = vector.load %arg7[%c0_14, %c0_15, %c0_16] : memref<1x32x128xf32, #tpu.memory_space<vmem>>, vector<1x32x128xf32>
      %20 = arith.addf %19, %18 : vector<1x32x128xf32>
      %c0_17 = arith.constant 0 : index
      %c0_18 = arith.constant 0 : index
      %c0_19 = arith.constant 0 : index
      %21 = vector.load %arg7[%c0_17, %c0_18, %c0_19] : memref<1x32x128xf32, #tpu.memory_space<vmem>>, vector<1x32x128xf32>
      tpu.vector_store %arg7[%c0_17, %c0_18, %c0_19], %20 {strides = array<i32>} : memref<1x32x128xf32, #tpu.memory_space<vmem>>, vector<1x32x128xf32>,
    } else {
    }
    %c1_i32_4 = arith.constant 1 : i32
    %9 = arith.cmpi eq, %arg1, %c1_i32_4 : i32
    %10 = arith.extui %9 : i1 to i32
    %c0_i32_5 = arith.constant 0 : i32
    %11 = arith.cmpi ne, %10, %c0_i32_5 : i32
    scf.if %11 {
      %c0 = arith.constant 0 : index
      %c0_6 = arith.constant 0 : index
      %c0_7 = arith.constant 0 : index
      %12 = vector.load %arg7[%c0, %c0_6, %c0_7] : memref<1x32x128xf32, #tpu.memory_space<vmem>>, vector<1x32x128xf32>
      %cst = arith.constant dense<0.000000e+00> : vector<1x32xf32>
      %13 = vector.multi_reduction <add>, %12, %cst [2] : vector<1x32x128xf32> to vector<1x32xf32>
      %cst_8 = arith.constant 0.00127551018 : f32
      %14 = vector.broadcast %cst_8 : f32 to vector<1x32xf32>
      %15 = arith.mulf %13, %14 : vector<1x32xf32>
      %c0_9 = arith.constant 0 : index
      %c0_10 = arith.constant 0 : index
      %c0_11 = arith.constant 0 : index
      %16 = vector.load %arg3[%c0_9, %c0_10, %c0_11] : memref<5x128x128xf32, #tpu.memory_space<vmem>>, vector<1x32x128xf32>
      %17 = vector.shape_cast %16 : vector<1x32x128xf32> to vector<32x128xf32>
      %cst_12 = arith.constant dense<0.000000e+00> : vector<1x128xf32>
      %18 = tpu.matmul %15, %17, %cst_12 {dimension_numbers = #tpu.dot_dimension_numbers<[1], [0], [0], [1], [0, 0, 1, 1], [], []>} : vector<1x32xf32>, vector<32x128xf32>, vector<1x128xf32> -> vector<1x128xf32>
      %c0_13 = arith.constant 0 : index
      %c0_14 = arith.constant 0 : index
      %c0_15 = arith.constant 0 : index
      %19 = vector.load %arg4[%c0_13, %c0_14, %c0_15] : memref<5x1x128xf32, #tpu.memory_space<vmem>>, vector<1x1x128xf32>
      %20 = vector.shape_cast %19 : vector<1x1x128xf32> to vector<1x128xf32>
      %21 = arith.addf %18, %20 : vector<1x128xf32>
      %c0_16 = arith.constant 0 : index
      %c0_17 = arith.constant 0 : index
      %c0_18 = arith.constant 0 : index
      %22 = vector.load %arg5[%c0_16, %c0_17, %c0_18] : memref<5x1x128xf32, #tpu.memory_space<vmem>>, vector<1x1x128xf32>
      %23 = vector.shape_cast %22 : vector<1x1x128xf32> to vector<1x128xf32>
      %24 = arith.maximumf %21, %23 : vector<1x128xf32>
      %c1 = arith.constant 1 : index
      %c0_19 = arith.constant 0 : index
      %c0_20 = arith.constant 0 : index
      %25 = vector.load %arg3[%c1, %c0_19, %c0_20] : memref<5x128x128xf32, #tpu.memory_space<vmem>>, vector<1x128x128xf32>
      %26 = vector.shape_cast %25 : vector<1x128x128xf32> to vector<128x128xf32>
      %cst_21 = arith.constant dense<0.000000e+00> : vector<1x128xf32>
      %27 = tpu.matmul %24, %26, %cst_21 {dimension_numbers = #tpu.dot_dimension_numbers<[1], [0], [0], [1], [0, 0, 1, 1], [], []>} : vector<1x128xf32>, vector<128x128xf32>, vector<1x128xf32> -> vector<1x128xf32>
      %c1_22 = arith.constant 1 : index
      %c0_23 = arith.constant 0 : index
      %c0_24 = arith.constant 0 : index
      %28 = vector.load %arg4[%c1_22, %c0_23, %c0_24] : memref<5x1x128xf32, #tpu.memory_space<vmem>>, vector<1x1x128xf32>
      %29 = vector.shape_cast %28 : vector<1x1x128xf32> to vector<1x128xf32>
      %30 = arith.addf %27, %29 : vector<1x128xf32>
      %c1_25 = arith.constant 1 : index
      %c0_26 = arith.constant 0 : index
      %c0_27 = arith.constant 0 : index
      %31 = vector.load %arg5[%c1_25, %c0_26, %c0_27] : memref<5x1x128xf32, #tpu.memory_space<vmem>>, vector<1x1x128xf32>
      %32 = vector.shape_cast %31 : vector<1x1x128xf32> to vector<1x128xf32>
      %33 = arith.maximumf %30, %32 : vector<1x128xf32>
      %c2 = arith.constant 2 : index
      %c0_28 = arith.constant 0 : index
      %c0_29 = arith.constant 0 : index
      %34 = vector.load %arg3[%c2, %c0_28, %c0_29] : memref<5x128x128xf32, #tpu.memory_space<vmem>>, vector<1x128x128xf32>
      %35 = vector.shape_cast %34 : vector<1x128x128xf32> to vector<128x128xf32>
      %cst_30 = arith.constant dense<0.000000e+00> : vector<1x128xf32>
      %36 = tpu.matmul %33, %35, %cst_30 {dimension_numbers = #tpu.dot_dimension_numbers<[1], [0], [0], [1], [0, 0, 1, 1], [], []>} : vector<1x128xf32>, vector<128x128xf32>, vector<1x128xf32> -> vector<1x128xf32>
      %c2_31 = arith.constant 2 : index
      %c0_32 = arith.constant 0 : index
      %c0_33 = arith.constant 0 : index
      %37 = vector.load %arg4[%c2_31, %c0_32, %c0_33] : memref<5x1x128xf32, #tpu.memory_space<vmem>>, vector<1x1x128xf32>
      %38 = vector.shape_cast %37 : vector<1x1x128xf32> to vector<1x128xf32>
      %39 = arith.addf %36, %38 : vector<1x128xf32>
      %c2_34 = arith.constant 2 : index
      %c0_35 = arith.constant 0 : index
      %c0_36 = arith.constant 0 : index
      %40 = vector.load %arg5[%c2_34, %c0_35, %c0_36] : memref<5x1x128xf32, #tpu.memory_space<vmem>>, vector<1x1x128xf32>
      %41 = vector.shape_cast %40 : vector<1x1x128xf32> to vector<1x128xf32>
      %42 = arith.maximumf %39, %41 : vector<1x128xf32>
      %c3 = arith.constant 3 : index
      %c0_37 = arith.constant 0 : index
      %c0_38 = arith.constant 0 : index
      %43 = vector.load %arg3[%c3, %c0_37, %c0_38] : memref<5x128x128xf32, #tpu.memory_space<vmem>>, vector<1x128x128xf32>
      %44 = vector.shape_cast %43 : vector<1x128x128xf32> to vector<128x128xf32>
      %cst_39 = arith.constant dense<0.000000e+00> : vector<1x128xf32>
      %45 = tpu.matmul %42, %44, %cst_39 {dimension_numbers = #tpu.dot_dimension_numbers<[1], [0], [0], [1], [0, 0, 1, 1], [], []>} : vector<1x128xf32>, vector<128x128xf32>, vector<1x128xf32> -> vector<1x128xf32>
      %c3_40 = arith.constant 3 : index
      %c0_41 = arith.constant 0 : index
      %c0_42 = arith.constant 0 : index
      %46 = vector.load %arg4[%c3_40, %c0_41, %c0_42] : memref<5x1x128xf32, #tpu.memory_space<vmem>>, vector<1x1x128xf32>
      %47 = vector.shape_cast %46 : vector<1x1x128xf32> to vector<1x128xf32>
      %48 = arith.addf %45, %47 : vector<1x128xf32>
      %c3_43 = arith.constant 3 : index
      %c0_44 = arith.constant 0 : index
      %c0_45 = arith.constant 0 : index
      %49 = vector.load %arg5[%c3_43, %c0_44, %c0_45] : memref<5x1x128xf32, #tpu.memory_space<vmem>>, vector<1x1x128xf32>
      %50 = vector.shape_cast %49 : vector<1x1x128xf32> to vector<1x128xf32>
      %51 = arith.maximumf %48, %50 : vector<1x128xf32>
      %c4 = arith.constant 4 : index
      %c0_46 = arith.constant 0 : index
      %c0_47 = arith.constant 0 : index
      %52 = vector.load %arg3[%c4, %c0_46, %c0_47] : memref<5x128x128xf32, #tpu.memory_space<vmem>>, vector<1x128x128xf32>
      %53 = vector.shape_cast %52 : vector<1x128x128xf32> to vector<128x128xf32>
      %cst_48 = arith.constant dense<0.000000e+00> : vector<1x128xf32>
      %54 = tpu.matmul %51, %53, %cst_48 {dimension_numbers = #tpu.dot_dimension_numbers<[1], [0], [0], [1], [0, 0, 1, 1], [], []>} : vector<1x128xf32>, vector<128x128xf32>, vector<1x128xf32> -> vector<1x128xf32>
      %c4_49 = arith.constant 4 : index
      %c0_50 = arith.constant 0 : index
      %c0_51 = arith.constant 0 : index
      %55 = vector.load %arg4[%c4_49, %c0_50, %c0_51] : memref<5x1x128xf32, #tpu.memory_space<vmem>>, vector<1x1x128xf32>
      %56 = vector.shape_cast %55 : vector<1x1x128xf32> to vector<1x128xf32>
      %57 = arith.addf %54, %56 : vector<1x128xf32>
      %c4_52 = arith.constant 4 : index
      %c0_53 = arith.constant 0 : index
      %c0_54 = arith.constant 0 : index
      %58 = vector.load %arg5[%c4_52, %c0_53, %c0_54] : memref<5x1x128xf32, #tpu.memory_space<vmem>>, vector<1x1x128xf32>
      %59 = vector.shape_cast %58 : vector<1x1x128xf32> to vector<1x128xf32>
      %60 = arith.maximumf %57, %59 : vector<1x128xf32>
      %61 = vector.extract_strided_slice %60 {offsets = [0, 0], sizes = [1, 32], strides = [1, 1]} : vector<1x128xf32> to vector<1x32xf32>
      %62 = vector.shape_cast %61 : vector<1x32xf32> to vector<1x1x32xf32>
      %c0_55 = arith.constant 0 : index
      %c0_56 = arith.constant 0 : index
      %c0_57 = arith.constant 0 : index
      %63 = vector.load %arg6[%c0_55, %c0_56, %c0_57] : memref<1x1x32xf32, #tpu.memory_space<vmem>>, vector<1x1x32xf32>
      tpu.vector_store %arg6[%c0_55, %c0_56, %c0_57], %62 {strides = array<i32>} : memref<1x1x32xf32, #tpu.memory_space<vmem>>, vector<1x1x32xf32>,
    } else {
    }
    return
  }
  func.func @transform_0(%arg0: i32, %arg1: i32) -> (i32, i32, i32) {
    %c0_i32 = arith.constant 0 : i32
    %c0_i32_0 = arith.constant 0 : i32
    return %arg0, %c0_i32, %arg1 : i32, i32, i32
  }
  func.func @transform_1(%arg0: i32, %arg1: i32) -> (i32, i32, i32) {
    %c0_i32 = arith.constant 0 : i32
    %c0_i32_0 = arith.constant 0 : i32
    %c0_i32_1 = arith.constant 0 : i32
    %c0_i32_2 = arith.constant 0 : i32
    return %c0_i32, %c0_i32_0, %c0_i32_1 : i32, i32, i32
  }
  func.func @transform_2(%arg0: i32, %arg1: i32) -> (i32, i32, i32) {
    %c0_i32 = arith.constant 0 : i32
    %c0_i32_0 = arith.constant 0 : i32
    %c0_i32_1 = arith.constant 0 : i32
    %c0_i32_2 = arith.constant 0 : i32
    return %c0_i32, %c0_i32_0, %c0_i32_1 : i32, i32, i32
  }
  func.func @transform_3(%arg0: i32, %arg1: i32) -> (i32, i32, i32) {
    %c0_i32 = arith.constant 0 : i32
    %c0_i32_0 = arith.constant 0 : i32
    %c0_i32_1 = arith.constant 0 : i32
    %c0_i32_2 = arith.constant 0 : i32
    return %c0_i32, %c0_i32_0, %c0_i32_1 : i32, i32, i32
  }
  func.func @transform_4(%arg0: i32, %arg1: i32) -> (i32, i32, i32) {
    %c0_i32 = arith.constant 0 : i32
    %c0_i32_0 = arith.constant 0 : i32
    %c0_i32_1 = arith.constant 0 : i32
    return %arg0, %c0_i32, %c0_i32_0 : i32, i32, i32
  }
}

</mosaic_0001>

<llo_original>
// kernel: tpu_custom_call.1
$region0: #{tpu_custom_call.1}
  #allocation0 [shape = 'u32[]', space=smem, size = 0x4, offset = 0x4, fixed_abs, tag = 'smem constant byte address 0x4 - core index']
  #allocation1 [shape = 'u32[144,128]{1,0:T(1,128)}', space=vmem, size = 0x12000, scoped, tag = 'internal scratch']
  #allocation2 [shape = 'f32[1,32,128]{2,1,0:T(8,128)}', space=vmem, size = 0x4000, scoped, tag = 'scratch operand']
  %s0 = inlined_call_operand.hbm [shape: f32[2,32,784], index: 0, kind: input, shape index: {}]
  %s1 = inlined_call_operand.hbm [shape: f32[5,128,128], index: 1, kind: input, shape index: {}]
  %s2 = inlined_call_operand.hbm [shape: f32[5,1,128], index: 2, kind: input, shape index: {}]
  %s3 = inlined_call_operand.vmem [shape: f32[5,1,128], index: 3, kind: input, shape index: {}]
  %s4 = inlined_call_operand.hbm [shape: f32[2,1,32], index: 4, kind: output, shape index: {}]
  %s5 = sld [smem:[#allocation0]]
  $region77: #{tpu_custom_call.1} parent=0
    _
  %s7 = ssub.s32 1, %s5
  %s8 = scalar_select 0, %s7, %s5
  $region1: #{tpu_custom_call.1} parent=0
    #allocation3 [shape = 'u8[131072]{0}', space=vmem, size = 0x20000, scoped, tag = 'input window, operand 0']
    #allocation4 [shape = 's32[2]{0}', space=sflag, size = 0x8, scoped, tag = 'scoped memory for tpu_custom_call.1']
    #allocation5 [shape = 's32[2]{0}', space=sflag, size = 0x8, scoped, tag = 'scoped memory for tpu_custom_call.1']
    #allocation6 [shape = 'u8[327680]{0}', space=vmem, size = 0x50000, scoped, tag = 'input window, operand 1, single buffered']
    #allocation7 [shape = 's32[1]{0}', space=sflag, size = 0x4, scoped, tag = 'scoped memory for tpu_custom_call.1']
    #allocation8 [shape = 'u8[2560]{0}', space=vmem, size = 0xc00, scoped, tag = 'input window, operand 2, single buffered']
    #allocation9 [shape = 'u8[1024]{0}', space=vmem, size = 0x400, scoped, tag = 'output window, operand 0']
    %9 = vsyncpa [#allocation4], 0
    %s10 = scalar_lea.sflag [#allocation4], 1
    %11 = vsyncpa %s10, 0
    %12 = vsyncpa [#allocation7], 0
    %13 = vsyncpa [#allocation5], 0
    %s14 = scalar_lea.sflag [#allocation5], 1
    %15 = vsyncpa %s14, 0
    loop: start=0, step=1, limit=6
    $region2: #{tpu_custom_call.1} parent=1 // loop_pre_header
      _
    $region3: #{tpu_custom_call.1} parent=1 // loop_header
      %s17 = sphi 0, %s21
      %p18 = scmp.ge.s32.totalorder %s17, 6
      %s24 = sphi 0, %s36
      %s25 = sphi 0, %s32
      %s26 = sphi 0, %s24
      %s27 = sphi 0, %s25
      %s28 = sphi 0, %s26
      %s29 = sphi 0, %s27
      %s41 = sphi 0, %s43
      %s44 = sphi 0, %s41
      %s45 = sphi 0, %s44
      %s61 = sphi 0, %s45
      %s65 = sphi 0, %s65
      %s67 = sphi 0, %s65
      %s68 = sphi 0, %s67
      %s82 = sphi 0, %s68
      %s86 = sphi 0, %s86
      %s88 = sphi 0, %s86
      %s89 = sphi 0, %s88
      %s103 = sphi 0, %s89
      %s107 = sphi 0, %s107
      %s109 = sphi 0, %s107
      %s110 = sphi 0, %s109
      %s124 = sphi 0, %s110
      %s130 = sphi 0, %s132
      %s133 = sphi 0, %s130
      %s134 = sphi 0, %s133
      %s150 = sphi 0, %s134
    $region4: #{tpu_custom_call.1} parent=1 // loop_header_branch
      %20 = sbr.rel (%p18) target = $region8
    $region5: #{tpu_custom_call.1} parent=1 // loop_body
      %s22 = ssub.s32 %s17, 1
      %s23 = ssub.s32 %s17, 2
      %s30 = sadd.s32 1, %s25
      %p31 = scmp.ge.s32.totalorder %s30, 2
      %s32 = scalar_select %p31, 0, %s30
      %s33 = sadd.s32 1, %s24
      %s34 = scalar_select %p31, %s33, %s24
      %p35 = scmp.ge.s32.totalorder %s34, 2
      %s36 = scalar_select %p35, 0, %s34
      %s37 = ssub.s32 %s24, %s36
      %s38 = ssub.s32 %s25, %s32
      %s39 = sor.u32 %s37, %s38
      %p40 = scmp.eq.s32.totalorder %s39, 0
      %s42 = sadd.s32 %s41, 1
      %s43 = scalar_select %p40, %s41, %s42
      %p46 = pneg %p40
      %p47 = scmp.eq.s32.totalorder %s17, 3
      %p48 = por %p46, %p47
      %p49 = scmp.ne.s32.totalorder %s41, %s44
      %p50 = scmp.eq.s32.totalorder %s17, 0
      %p51 = por %p49, %p50
      %p52 = scmp.ne.s32.totalorder %s41, %s44
      %p53 = scmp.eq.s32.totalorder %s22, 3
      %p54 = por %p52, %p53
      %p55 = scmp.ne.s32.totalorder %s44, %s45
      %p56 = scmp.eq.s32.totalorder %s22, 0
      %p57 = por %p55, %p56
      %p58 = scmp.ne.s32.totalorder %s44, %s45
      %p59 = scmp.eq.s32.totalorder %s23, 3
      %p60 = por %p58, %p59
      %p62 = scmp.ne.s32.totalorder %s45, %s61
      %p63 = scmp.eq.s32.totalorder %s23, 0
      %p64 = por %p62, %p63
      %s66 = sadd.s32 %s65, 1
      %p69 = scmp.eq.s32.totalorder %s17, 3
      %p70 = scmp.ne.s32.totalorder %s65, %s67
      %p71 = scmp.eq.s32.totalorder %s17, 0
      %p72 = por %p70, %p71
      %p73 = scmp.ne.s32.totalorder %s65, %s67
      %p74 = scmp.eq.s32.totalorder %s22, 3
      %p75 = por %p73, %p74
      %p76 = scmp.ne.s32.totalorder %s67, %s68
      %p77 = scmp.eq.s32.totalorder %s22, 0
      %p78 = por %p76, %p77
      %p79 = scmp.ne.s32.totalorder %s67, %s68
      %p80 = scmp.eq.s32.totalorder %s23, 3
      %p81 = por %p79, %p80
      %p83 = scmp.ne.s32.totalorder %s68, %s82
      %p84 = scmp.eq.s32.totalorder %s23, 0
      %p85 = por %p83, %p84
      %s87 = sadd.s32 %s86, 1
      %p90 = scmp.eq.s32.totalorder %s17, 3
      %p91 = scmp.ne.s32.totalorder %s86, %s88
      %p92 = scmp.eq.s32.totalorder %s17, 0
      %p93 = por %p91, %p92
      %p94 = scmp.ne.s32.totalorder %s86, %s88
      %p95 = scmp.eq.s32.totalorder %s22, 3
      %p96 = por %p94, %p95
      %p97 = scmp.ne.s32.totalorder %s88, %s89
      %p98 = scmp.eq.s32.totalorder %s22, 0
      %p99 = por %p97, %p98
      %p100 = scmp.ne.s32.totalorder %s88, %s89
      %p101 = scmp.eq.s32.totalorder %s23, 3
      %p102 = por %p100, %p101
      %p104 = scmp.ne.s32.totalorder %s89, %s103
      %p105 = scmp.eq.s32.totalorder %s23, 0
      %p106 = por %p104, %p105
      %s108 = sadd.s32 %s107, 1
      %p111 = scmp.eq.s32.totalorder %s17, 3
      %p112 = scmp.ne.s32.totalorder %s107, %s109
      %p113 = scmp.eq.s32.totalorder %s17, 0
      %p114 = por %p112, %p113
      %p115 = scmp.ne.s32.totalorder %s107, %s109
      %p116 = scmp.eq.s32.totalorder %s22, 3
      %p117 = por %p115, %p116
      %p118 = scmp.ne.s32.totalorder %s109, %s110
      %p119 = scmp.eq.s32.totalorder %s22, 0
      %p120 = por %p118, %p119
      %p121 = scmp.ne.s32.totalorder %s109, %s110
      %p122 = scmp.eq.s32.totalorder %s23, 3
      %p123 = por %p121, %p122
      %p125 = scmp.ne.s32.totalorder %s110, %s124
      %p126 = scmp.eq.s32.totalorder %s23, 0
      %p127 = por %p125, %p126
      %s128 = ssub.s32 %s24, %s36
      %p129 = scmp.eq.s32.totalorder %s128, 0
      %s131 = sadd.s32 %s130, 1
      %s132 = scalar_select %p129, %s130, %s131
      %p135 = pneg %p129
      %p136 = scmp.eq.s32.totalorder %s17, 3
      %p137 = por %p135, %p136
      %p138 = scmp.ne.s32.totalorder %s130, %s133
      %p139 = scmp.eq.s32.totalorder %s17, 0
      %p140 = por %p138, %p139
      %p141 = scmp.ne.s32.totalorder %s130, %s133
      %p142 = scmp.eq.s32.totalorder %s22, 3
      %p143 = por %p141, %p142
      %p144 = scmp.ne.s32.totalorder %s133, %s134
      %p145 = scmp.eq.s32.totalorder %s22, 0
      %p146 = por %p144, %p145
      %p147 = scmp.ne.s32.totalorder %s133, %s134
      %p148 = scmp.eq.s32.totalorder %s23, 3
      %p149 = por %p147, %p148
      %p151 = scmp.ne.s32.totalorder %s134, %s150
      %p152 = scmp.eq.s32.totalorder %s23, 0
      %p153 = por %p151, %p152
      %p154 = scmp.le.s32.totalorder 1, %s17
      %p155 = scmp.lt.s32.totalorder %s17, 5
      %p156 = pnand %p154, %p155
      %p157 = pneg %p156
      // Predicated region
      $region9: #{tpu_custom_call.1} parent=5 // pred_check
        _
      $region10: #{tpu_custom_call.1} parent=5 // pred_check_branch
        %159 = sbr.rel (%p156) target = $region12
      $region11: #{tpu_custom_call.1} parent=5 // pred_region
        %s160 = ssub.s32 %s17, 1
        // Predicated region
        $region13: #{tpu_custom_call.1} parent=11 // pred_check
          %p161 = pneg %p78
        $region14: #{tpu_custom_call.1} parent=11 // pred_check_branch
          %163 = sbr.rel (%p161) target = $region16
        $region15: #{tpu_custom_call.1} parent=11 // pred_region
          %s165 = ssub.s32 10240, 10240
          %166 = vsyncadd [#allocation7], %s165
          %s167 = sshll.u32 [#allocation6], 4
          %s168 = int_to_ptr.vmem [resolvable:$true] %s167
          %173 = dma.hbm_to_vmem [thread:$0]  %s1, 10240, %s168, [#allocation7], 128, 128, 8
        $region16: #{tpu_custom_call.1} parent=11 // pred_fallthru
          _
        // Predicated region
        $region17: #{tpu_custom_call.1} parent=11 // pred_check
          %p174 = pneg %p99
        $region18: #{tpu_custom_call.1} parent=11 // pred_check_branch
          %176 = sbr.rel (%p174) target = $region20
        $region19: #{tpu_custom_call.1} parent=11 // pred_region
          %s178 = ssub.s32 80, 80
          %179 = vsyncadd [#allocation7], %s178
          %s180 = sshll.u32 [#allocation8], 4
          %s181 = int_to_ptr.vmem [resolvable:$true] %s180
          %186 = dma.hbm_to_vmem [thread:$0]  %s2, 80, %s181, [#allocation7], 16, 16, 1
        $region20: #{tpu_custom_call.1} parent=11 // pred_fallthru
          _
        // Predicated region
        $region21: #{tpu_custom_call.1} parent=11 // pred_check
          %p187 = pneg %p120
        $region22: #{tpu_custom_call.1} parent=11 // pred_check_branch
          %189 = sbr.rel (%p187) target = $region24
        $region23: #{tpu_custom_call.1} parent=11 // pred_region
          _
        $region24: #{tpu_custom_call.1} parent=11 // pred_fallthru
          _
      $region12: #{tpu_custom_call.1} parent=5 // pred_fallthru
        _
      %p190 = scmp.lt.s32.totalorder %s17, 4
      // Predicated region
      $region25: #{tpu_custom_call.1} parent=5 // pred_check
        %p191 = pneg %p190
      $region26: #{tpu_custom_call.1} parent=5 // pred_check_branch
        %193 = sbr.rel (%p191) target = $region28
      $region27: #{tpu_custom_call.1} parent=5 // pred_region
        // Predicated region
        $region29: #{tpu_custom_call.1} parent=27 // pred_check
          %p194 = pneg %p51
        $region30: #{tpu_custom_call.1} parent=27 // pred_check_branch
          %196 = sbr.rel (%p194) target = $region32
        $region31: #{tpu_custom_call.1} parent=27 // pred_region
          %s197 = sand.u32 %s41, 1
          %s198 = scalar_lea.sflag [#allocation4], %s197
          %s199 = sand.u32 %s41, 1
          %s200 = smul.addr %s199, 128
          %s201 = scalar_lea.vmem [#allocation3], %s200
          %s202 = smul.u32 4, %s25
          %s203 = ssub.s32 7, %s202
          %p204 = scmp.lt.s32.totalorder %s203, 4
          %s205 = scalar_select %p204, %s203, 4
          %s206 = smul.u32 512, %s205
          %s208 = ssub.s32 2048, %s206
          %209 = vsyncadd %s198, %s208
          %p210 = scmp.ne.s32.totalorder 0, %s206
          %s211 = smul.addr %s24, 28
          %s212 = sadd.s32 %s202, %s211
          %s213 = smul.addr %s212, 128
          %s214 = scalar_lea.hbm %s0, %s213
          %s215 = smul.u32 %s205, 8
          %s216 = smul.u32 %s215, 4
          %s217 = sshll.u32 %s201, 4
          %s218 = int_to_ptr.vmem [resolvable:$true] %s217
          %s219 = sshll.u32 %s216, 4
          %223 = dma.hbm_to_vmem [thread:$0]  (%p210), %s214, %s219, %s218, %s198, 896, 512, %s215
        $region32: #{tpu_custom_call.1} parent=27 // pred_fallthru
          _
      $region28: #{tpu_custom_call.1} parent=5 // pred_fallthru
        _
      %p224 = scmp.le.s32.totalorder 1, %s17
      %p225 = scmp.lt.s32.totalorder %s17, 5
      %p226 = pnand %p224, %p225
      %p227 = pneg %p226
      // Predicated region
      $region33: #{tpu_custom_call.1} parent=5 // pred_check
        _
      $region34: #{tpu_custom_call.1} parent=5 // pred_check_branch
        %229 = sbr.rel (%p226) target = $region36
      $region35: #{tpu_custom_call.1} parent=5 // pred_region
        %s230 = ssub.s32 %s17, 1
        %s231 = sand.u32 %s44, 1
        %s232 = scalar_lea.sflag [#allocation4], %s231
        %s233 = sand.u32 %s44, 1
        %s234 = smul.addr %s233, 128
        %s235 = scalar_lea.vmem [#allocation3], %s234
        // Predicated region
        $region37: #{tpu_custom_call.1} parent=35 // pred_check
          %p236 = pneg %p57
        $region38: #{tpu_custom_call.1} parent=35 // pred_check_branch
          %238 = sbr.rel (%p236) target = $region40
        $region39: #{tpu_custom_call.1} parent=35 // pred_region
          %239 = dma.done %s232, 2048
        $region40: #{tpu_custom_call.1} parent=35 // pred_fallthru
          _
        // Predicated region
        $region41: #{tpu_custom_call.1} parent=35 // pred_check
          %p240 = pneg %p78
        $region42: #{tpu_custom_call.1} parent=35 // pred_check_branch
          %242 = sbr.rel (%p240) target = $region44
        $region43: #{tpu_custom_call.1} parent=35 // pred_region
          %243 = dma.done [#allocation7], 10240
        $region44: #{tpu_custom_call.1} parent=35 // pred_fallthru
          _
        // Predicated region
        $region45: #{tpu_custom_call.1} parent=35 // pred_check
          %p244 = pneg %p99
        $region46: #{tpu_custom_call.1} parent=35 // pred_check_branch
          %246 = sbr.rel (%p244) target = $region48
        $region47: #{tpu_custom_call.1} parent=35 // pred_region
          %247 = dma.done [#allocation7], 80
        $region48: #{tpu_custom_call.1} parent=35 // pred_fallthru
          _
        %s248 = sand.u32 %s44, 1
        %s249 = scalar_lea.sflag [#allocation4], %s248
        %s250 = sand.u32 %s44, 1
        %s251 = smul.addr %s250, 128
        %s252 = scalar_lea.vmem [#allocation3], %s251
        %p253 = pneg %p57
        %p254 = pneg %p54
        %p255 = pneg %p78
        %p256 = pneg %p75
        %p257 = pneg %p99
        %p258 = pneg %p96
        %p259 = pneg %p120
        %p260 = pneg %p117
        %p261 = pneg %p146
        %p262 = pneg %p143
        %s263 = sand.u32 %s133, 1
        %s264 = scalar_lea.sflag [#allocation5], %s263
        %s265 = sand.u32 %s133, 1
        %s266 = scalar_lea.vmem [#allocation9], %s265
        %s267 = smul.u32 4, %s27
        %s268 = ssub.s32 7, %s267
        %p269 = scmp.lt.s32.totalorder %s268, 4
        %s270 = scalar_select %p269, %s268, 4
        %s271 = smul.u32 512, %s270
        %p272 = scmp.eq.s32.totalorder %s27, 0
        // Predicated region
        $region49: #{tpu_custom_call.1} parent=35 // pred_check
          %p273 = pneg %p272
        $region50: #{tpu_custom_call.1} parent=35 // pred_check_branch
          %275 = sbr.rel (%p273) target = $region52
        $region51: #{tpu_custom_call.1} parent=35 // pred_region
          %276 = vst [vmem:[#allocation2] sm:$0xff] 0.0
          %277 = vst [vmem:[#allocation2 + $0x8] sm:$0xff] 0.0
          %278 = vst [vmem:[#allocation2 + $0x10] sm:$0xff] 0.0
          %279 = vst [vmem:[#allocation2 + $0x18] sm:$0xff] 0.0
        $region52: #{tpu_custom_call.1} parent=35 // pred_fallthru
          _
        %p280 = scmp.eq.s32.totalorder %s27, 1
        // Predicated region
        $region53: #{tpu_custom_call.1} parent=35 // pred_check
          %p281 = pneg %p280
        $region54: #{tpu_custom_call.1} parent=35 // pred_check_branch
          %283 = sbr.rel (%p281) target = $region56
        $region55: #{tpu_custom_call.1} parent=35 // pred_region
          %v284 = vld [vmem:[%s235] sm:$0xff]
          %v285 = vld [vmem:[%s235 + $0x20] sm:$0xff]
          %v286 = vld [vmem:[%s235 + $0x40] sm:$0xff]
          %v287 = vld [vmem:[%s235 + $0x60] sm:$0xff]
          %v288 = vlaneseq
          %v289 = vand.u32 %v288, 127
          %s290 = smul.u32 %s27, 512
          %v291 = vstv %s290
          %v292 = vadd.s32 %v291, %v289
          %vm293 = vcmp.lt.s32.totalorder %v292, 784
          %v294 = vsel %vm293, %v284, 0.0
          %v295 = vsel %vm293, %v285, 0.0
          %v296 = vsel %vm293, %v286, 0.0
          %v297 = vsel %vm293, %v287, 0.0
          %v298 = vld [vmem:[%s235 + $0x8] sm:$0xff]
          %v299 = vld [vmem:[%s235 + $0x28] sm:$0xff]
          %v300 = vld [vmem:[%s235 + $0x48] sm:$0xff]
          %v301 = vld [vmem:[%s235 + $0x68] sm:$0xff]
          %s302 = sadd.s32 %s290, 128
          %v303 = vstv %s302
          %v304 = vadd.s32 %v303, %v289
          %vm305 = vcmp.lt.s32.totalorder %v304, 784
          %v306 = vsel %vm305, %v298, 0.0
          %v307 = vsel %vm305, %v299, 0.0
          %v308 = vsel %vm305, %v300, 0.0
          %v309 = vsel %vm305, %v301, 0.0
          %v310 = vadd.f32 %v294, %v306
          %v311 = vadd.f32 %v295, %v307
          %v312 = vadd.f32 %v296, %v308
          %v313 = vadd.f32 %v297, %v309
          %v314 = vld [vmem:[%s235 + $0x10] sm:$0xff]
          %v315 = vld [vmem:[%s235 + $0x30] sm:$0xff]
          %v316 = vld [vmem:[%s235 + $0x50] sm:$0xff]
          %v317 = vld [vmem:[%s235 + $0x70] sm:$0xff]
          %s318 = sadd.s32 %s290, 256
          %v319 = vstv %s318
          %v320 = vadd.s32 %v319, %v289
          %vm321 = vcmp.lt.s32.totalorder %v320, 784
          %v322 = vsel %vm321, %v314, 0.0
          %v323 = vsel %vm321, %v315, 0.0
          %v324 = vsel %vm321, %v316, 0.0
          %v325 = vsel %vm321, %v317, 0.0
          %v326 = vadd.f32 %v310, %v322
          %v327 = vadd.f32 %v311, %v323
          %v328 = vadd.f32 %v312, %v324
          %v329 = vadd.f32 %v313, %v325
          %v330 = vld [vmem:[%s235 + $0x18] sm:$0xff]
          %v331 = vld [vmem:[%s235 + $0x38] sm:$0xff]
          %v332 = vld [vmem:[%s235 + $0x58] sm:$0xff]
          %v333 = vld [vmem:[%s235 + $0x78] sm:$0xff]
          %s334 = sadd.s32 %s290, 384
          %v335 = vstv %s334
          %v336 = vadd.s32 %v335, %v289
          %vm337 = vcmp.lt.s32.totalorder %v336, 784
          %v338 = vsel %vm337, %v330, 0.0
          %v339 = vsel %vm337, %v331, 0.0
          %v340 = vsel %vm337, %v332, 0.0
          %v341 = vsel %vm337, %v333, 0.0
          %v342 = vadd.f32 %v326, %v338
          %v343 = vadd.f32 %v327, %v339
          %v344 = vadd.f32 %v328, %v340
          %v345 = vadd.f32 %v329, %v341
          %v346 = vld [vmem:[#allocation2] sm:$0xff]
          %v347 = vld [vmem:[#allocation2 + $0x8] sm:$0xff]
          %v348 = vld [vmem:[#allocation2 + $0x10] sm:$0xff]
          %v349 = vld [vmem:[#allocation2 + $0x18] sm:$0xff]
          %v350 = vadd.f32 %v346, %v342
          %v351 = vadd.f32 %v347, %v343
          %v352 = vadd.f32 %v348, %v344
          %v353 = vadd.f32 %v349, %v345
          %354 = vst [vmem:[#allocation2] sm:$0xff] %v350
          %355 = vst [vmem:[#allocation2 + $0x8] sm:$0xff] %v351
          %356 = vst [vmem:[#allocation2 + $0x10] sm:$0xff] %v352
          %357 = vst [vmem:[#allocation2 + $0x18] sm:$0xff] %v353
        $region56: #{tpu_custom_call.1} parent=35 // pred_fallthru
          _
        %p358 = scmp.ne.s32.totalorder %s27, 1
        // Predicated region
        $region57: #{tpu_custom_call.1} parent=35 // pred_check
          %p359 = pneg %p358
        $region58: #{tpu_custom_call.1} parent=35 // pred_check_branch
          %361 = sbr.rel (%p359) target = $region60
        $region59: #{tpu_custom_call.1} parent=35 // pred_region
          %v362 = vld [vmem:[%s235] sm:$0xff]
          %v363 = vld [vmem:[%s235 + $0x20] sm:$0xff]
          %v364 = vld [vmem:[%s235 + $0x40] sm:$0xff]
          %v365 = vld [vmem:[%s235 + $0x60] sm:$0xff]
          %v366 = vld [vmem:[%s235 + $0x8] sm:$0xff]
          %v367 = vld [vmem:[%s235 + $0x28] sm:$0xff]
          %v368 = vld [vmem:[%s235 + $0x48] sm:$0xff]
          %v369 = vld [vmem:[%s235 + $0x68] sm:$0xff]
          %v370 = vadd.f32 %v362, %v366
          %v371 = vadd.f32 %v363, %v367
          %v372 = vadd.f32 %v364, %v368
          %v373 = vadd.f32 %v365, %v369
          %v374 = vld [vmem:[%s235 + $0x10] sm:$0xff]
          %v375 = vld [vmem:[%s235 + $0x30] sm:$0xff]
          %v376 = vld [vmem:[%s235 + $0x50] sm:$0xff]
          %v377 = vld [vmem:[%s235 + $0x70] sm:$0xff]
          %v378 = vadd.f32 %v370, %v374
          %v379 = vadd.f32 %v371, %v375
          %v380 = vadd.f32 %v372, %v376
          %v381 = vadd.f32 %v373, %v377
          %v382 = vld [vmem:[%s235 + $0x18] sm:$0xff]
          %v383 = vld [vmem:[%s235 + $0x38] sm:$0xff]
          %v384 = vld [vmem:[%s235 + $0x58] sm:$0xff]
          %v385 = vld [vmem:[%s235 + $0x78] sm:$0xff]
          %v386 = vadd.f32 %v378, %v382
          %v387 = vadd.f32 %v379, %v383
          %v388 = vadd.f32 %v380, %v384
          %v389 = vadd.f32 %v381, %v385
          %v390 = vld [vmem:[#allocation2] sm:$0xff]
          %v391 = vld [vmem:[#allocation2 + $0x8] sm:$0xff]
          %v392 = vld [vmem:[#allocation2 + $0x10] sm:$0xff]
          %v393 = vld [vmem:[#allocation2 + $0x18] sm:$0xff]
          %v394 = vadd.f32 %v390, %v386
          %v395 = vadd.f32 %v391, %v387
          %v396 = vadd.f32 %v392, %v388
          %v397 = vadd.f32 %v393, %v389
          %398 = vst [vmem:[#allocation2] sm:$0xff] %v394
          %399 = vst [vmem:[#allocation2 + $0x8] sm:$0xff] %v395
          %400 = vst [vmem:[#allocation2 + $0x10] sm:$0xff] %v396
          %401 = vst [vmem:[#allocation2 + $0x18] sm:$0xff] %v397
        $region60: #{tpu_custom_call.1} parent=35 // pred_fallthru
          _
        // Predicated region
        $region61: #{tpu_custom_call.1} parent=35 // pred_check
          %p402 = pneg %p280
        $region62: #{tpu_custom_call.1} parent=35 // pred_check_branch
          %404 = sbr.rel (%p402) target = $region64
        $region63: #{tpu_custom_call.1} parent=35 // pred_region
          %v405 = vld [vmem:[#allocation2] sm:$0xff]
          %v406 = vld [vmem:[#allocation2 + $0x8] sm:$0xff]
          %v407 = vld [vmem:[#allocation2 + $0x10] sm:$0xff]
          %v408 = vld [vmem:[#allocation2 + $0x18] sm:$0xff]
          %409 = vadd.xlane.f32.xlu0 %v405
          %v410 = vpop.xlane.xlu0 %409
          %411 = vadd.xlane.f32.xlu0 %v406
          %v412 = vpop.xlane.xlu0 %411
          %413 = vadd.xlane.f32.xlu0 %v407
          %v414 = vpop.xlane.xlu0 %413
          %415 = vadd.xlane.f32.xlu0 %v408
          %v416 = vpop.xlane.xlu0 %415
          %v417 = vmul.f32 %v410, 0.0012755102
          %v418 = vmul.f32 %v412, 0.0012755102
          %v419 = vmul.f32 %v414, 0.0012755102
          %v420 = vmul.f32 %v416, 0.0012755102
          %v421 = vld [vmem:[#allocation6] sm:$0xff]
          %v422 = vld [vmem:[#allocation6 + $0x8] sm:$0xff]
          %v423 = vld [vmem:[#allocation6 + $0x10] sm:$0xff]
          %v424 = vld [vmem:[#allocation6 + $0x18] sm:$0xff]
          %v425 = vld [vmem:[#allocation8] sm:$0x1]
          %v430 = vlaneseq
          %v431 = vand.u32 %v430, 127
          %v432 = vlaneseq
          %v433 = vshrl.u32 %v432, 7
          %v434 = vsub.s32 %v431, %v433
          %v435 = vrot.slane %v417, %v434
          %v436 = vadd.s32 %v431, 4294967288
          %v437 = vlaneseq
          %v438 = vshrl.u32 %v437, 7
          %v439 = vsub.s32 %v436, %v438
          %v440 = vrot.slane %v418, %v439
          %vm441 = vcmask 130112
          %v442 = vsel %vm441, %v440, %v435
          %v443 = vadd.s32 %v431, 4294967280
          %v444 = vlaneseq
          %v445 = vshrl.u32 %v444, 7
          %v446 = vsub.s32 %v443, %v445
          %v447 = vrot.slane %v419, %v446
          %vm448 = vcmask 195712
          %v449 = vsel %vm448, %v447, %v442
          %v450 = vadd.s32 %v431, 4294967272
          %v451 = vlaneseq
          %v452 = vshrl.u32 %v451, 7
          %v453 = vsub.s32 %v450, %v452
          %v454 = vrot.slane %v420, %v453
          %vm455 = vcmask 261312
          %v456 = vsel %vm455, %v454, %v449
          %vm457 = vcmask 261120
          %v458 = vsel %vm457, %v456, 0
          %460 = vmatprep.subr.mxu0 0.0
          %461 = vmatpush1.msra.mxu0 0.0
          %462 = vmatprep.subr.mxu0 0.0
          %463 = vmatpush1.msra.mxu0 0.0
          %464 = vmatprep.subr.mxu0 0.0
          %465 = vmatpush1.msra.mxu0 0.0
          %466 = vmatprep.subr.mxu0 0.0
          %467 = vmatpush1.msra.mxu0 0.0
          %468 = vmatprep.subr.mxu0 0.0
          %469 = vmatpush1.msra.mxu0 0.0
          %470 = vmatprep.subr.mxu0 0.0
          %471 = vmatpush1.msra.mxu0 0.0
          %472 = vmatprep.subr.mxu0 0.0
          %473 = vmatpush1.msra.mxu0 0.0
          %474 = vmatprep.subr.mxu0 0.0
          %475 = vmatpush1.msra.mxu0 0.0
          %476 = vmatprep.subr.mxu0 0.0
          %477 = vmatpush1.msra.mxu0 0.0
          %478 = vmatprep.subr.mxu0 0.0
          %479 = vmatpush1.msra.mxu0 0.0
          %480 = vmatprep.subr.mxu0 0.0
          %481 = vmatpush1.msra.mxu0 0.0
          %482 = vmatprep.subr.mxu0 0.0
          %483 = vmatpush1.msra.mxu0 0.0
          %484 = vmatprep.subr.mxu0 0.0
          %485 = vmatpush1.msra.mxu0 %v424
          %486 = vmatprep.subr.mxu0 0.0
          %487 = vmatpush1.msra.mxu0 %v423
          %488 = vmatprep.subr.mxu0 0.0
          %489 = vmatpush1.msra.mxu0 %v422
          %490 = vmatprep.subr.mxu0 0.0
          %491 = vmatpush1.msra.mxu0 %v421
          %492 = vmatprep.subr.mxu0 0.0
          %493 = vmatpush2.msra.mxu0 0.0
          %494 = vmatprep.subr.mxu0 0.0
          %495 = vmatpush2.msra.mxu0 0.0
          %496 = vmatprep.subr.mxu0 0.0
          %497 = vmatpush2.msra.mxu0 0.0
          %498 = vmatprep.subr.mxu0 0.0
          %499 = vmatpush2.msra.mxu0 0.0
          %500 = vmatprep.subr.mxu0 0.0
          %501 = vmatpush2.msra.mxu0 0.0
          %502 = vmatprep.subr.mxu0 0.0
          %503 = vmatpush2.msra.mxu0 0.0
          %504 = vmatprep.subr.mxu0 0.0
          %505 = vmatpush2.msra.mxu0 0.0
          %506 = vmatprep.subr.mxu0 0.0
          %507 = vmatpush2.msra.mxu0 0.0
          %508 = vmatprep.subr.mxu0 0.0
          %509 = vmatpush2.msra.mxu0 0.0
          %510 = vmatprep.subr.mxu0 0.0
          %511 = vmatpush2.msra.mxu0 0.0
          %512 = vmatprep.subr.mxu0 0.0
          %513 = vmatpush2.msra.mxu0 0.0
          %514 = vmatprep.subr.mxu0 0.0
          %515 = vmatpush2.msra.mxu0 0.0
          %516 = vmatprep.subr.mxu0 0.0
          %517 = vmatpush2.msra.mxu0 0.0
          %518 = vmatprep.subr.mxu0 0.0
          %519 = vmatpush2.msra.mxu0 0.0
          %520 = vmatprep.subr.mxu0 0.0
          %521 = vmatpush2.msra.mxu0 0.0
          %522 = vmatprep.subr.mxu0 0.0
          %523 = vmatpush2.msra.mxu0 0.0
          %524 = vmatprep.mubr.f32.mxu0 0.0
          %525 = vmatmul.mubr.f32.gmra.mxu0 %v458
          %v526 = vpop.f32.mrf.mxu0
          %v527 = vadd.f32 %v425, %v526
          %v528 = vpop.f32.mrf.mxu0
          %529 = vdwg.mxu0
          %v530 = vld [vmem:[%s3] sm:$0x1]
          %v531 = vmax.f32 %v527, %v530
          %s532 = scalar_lea.vmem [#allocation6], 128
          %v533 = vld [vmem:[%s532] sm:$0xff]
          %v534 = vld [vmem:[%s532 + $0x8] sm:$0xff]
          %v535 = vld [vmem:[%s532 + $0x10] sm:$0xff]
          %v536 = vld [vmem:[%s532 + $0x18] sm:$0xff]
          %v537 = vld [vmem:[%s532 + $0x20] sm:$0xff]
          %v538 = vld [vmem:[%s532 + $0x28] sm:$0xff]
          %v539 = vld [vmem:[%s532 + $0x30] sm:$0xff]
          %v540 = vld [vmem:[%s532 + $0x38] sm:$0xff]
          %v541 = vld [vmem:[%s532 + $0x40] sm:$0xff]
          %v542 = vld [vmem:[%s532 + $0x48] sm:$0xff]
          %v543 = vld [vmem:[%s532 + $0x50] sm:$0xff]
          %v544 = vld [vmem:[%s532 + $0x58] sm:$0xff]
          %v545 = vld [vmem:[%s532 + $0x60] sm:$0xff]
          %v546 = vld [vmem:[%s532 + $0x68] sm:$0xff]
          %v547 = vld [vmem:[%s532 + $0x70] sm:$0xff]
          %v548 = vld [vmem:[%s532 + $0x78] sm:$0xff]
          %s549 = scalar_lea.vmem [#allocation8], 1
          %v550 = vld [vmem:[%s549] sm:$0x1]
          %551 = vmatprep.subr.mxu0 0.0
          %552 = vmatpush1.msra.mxu0 %v548
          %553 = vmatprep.subr.mxu0 0.0
          %554 = vmatpush1.msra.mxu0 %v547
          %555 = vmatprep.subr.mxu0 0.0
          %556 = vmatpush1.msra.mxu0 %v546
          %557 = vmatprep.subr.mxu0 0.0
          %558 = vmatpush1.msra.mxu0 %v545
          %559 = vmatprep.subr.mxu0 0.0
          %560 = vmatpush1.msra.mxu0 %v544
          %561 = vmatprep.subr.mxu0 0.0
          %562 = vmatpush1.msra.mxu0 %v543
          %563 = vmatprep.subr.mxu0 0.0
          %564 = vmatpush1.msra.mxu0 %v542
          %565 = vmatprep.subr.mxu0 0.0
          %566 = vmatpush1.msra.mxu0 %v541
          %567 = vmatprep.subr.mxu0 0.0
          %568 = vmatpush1.msra.mxu0 %v540
          %569 = vmatprep.subr.mxu0 0.0
          %570 = vmatpush1.msra.mxu0 %v539
          %571 = vmatprep.subr.mxu0 0.0
          %572 = vmatpush1.msra.mxu0 %v538
          %573 = vmatprep.subr.mxu0 0.0
          %574 = vmatpush1.msra.mxu0 %v537
          %575 = vmatprep.subr.mxu0 0.0
          %576 = vmatpush1.msra.mxu0 %v536
          %577 = vmatprep.subr.mxu0 0.0
          %578 = vmatpush1.msra.mxu0 %v535
          %579 = vmatprep.subr.mxu0 0.0
          %580 = vmatpush1.msra.mxu0 %v534
          %581 = vmatprep.subr.mxu0 0.0
          %582 = vmatpush1.msra.mxu0 %v533
          %583 = vmatprep.subr.mxu0 0.0
          %584 = vmatpush2.msra.mxu0 0.0
          %585 = vmatprep.subr.mxu0 0.0
          %586 = vmatpush2.msra.mxu0 0.0
          %587 = vmatprep.subr.mxu0 0.0
          %588 = vmatpush2.msra.mxu0 0.0
          %589 = vmatprep.subr.mxu0 0.0
          %590 = vmatpush2.msra.mxu0 0.0
          %591 = vmatprep.subr.mxu0 0.0
          %592 = vmatpush2.msra.mxu0 0.0
          %593 = vmatprep.subr.mxu0 0.0
          %594 = vmatpush2.msra.mxu0 0.0
          %595 = vmatprep.subr.mxu0 0.0
          %596 = vmatpush2.msra.mxu0 0.0
          %597 = vmatprep.subr.mxu0 0.0
          %598 = vmatpush2.msra.mxu0 0.0
          %599 = vmatprep.subr.mxu0 0.0
          %600 = vmatpush2.msra.mxu0 0.0
          %601 = vmatprep.subr.mxu0 0.0
          %602 = vmatpush2.msra.mxu0 0.0
          %603 = vmatprep.subr.mxu0 0.0
          %604 = vmatpush2.msra.mxu0 0.0
          %605 = vmatprep.subr.mxu0 0.0
          %606 = vmatpush2.msra.mxu0 0.0
          %607 = vmatprep.subr.mxu0 0.0
          %608 = vmatpush2.msra.mxu0 0.0
          %609 = vmatprep.subr.mxu0 0.0
          %610 = vmatpush2.msra.mxu0 0.0
          %611 = vmatprep.subr.mxu0 0.0
          %612 = vmatpush2.msra.mxu0 0.0
          %613 = vmatprep.subr.mxu0 0.0
          %614 = vmatpush2.msra.mxu0 0.0
          %615 = vmatprep.mubr.f32.mxu0 0.0
          %616 = vmatmul.mubr.f32.gmra.mxu0 %v531
          %v617 = vpop.f32.mrf.mxu0
          %v618 = vadd.f32 %v550, %v617
          %v619 = vpop.f32.mrf.mxu0
          %620 = vdwg.mxu0
          %s621 = scalar_lea.vmem %s3, 1
          %v622 = vld [vmem:[%s621] sm:$0x1]
          %v623 = vmax.f32 %v618, %v622
          %s624 = scalar_lea.vmem [#allocation6], 256
          %v625 = vld [vmem:[%s624] sm:$0xff]
          %v626 = vld [vmem:[%s624 + $0x8] sm:$0xff]
          %v627 = vld [vmem:[%s624 + $0x10] sm:$0xff]
          %v628 = vld [vmem:[%s624 + $0x18] sm:$0xff]
          %v629 = vld [vmem:[%s624 + $0x20] sm:$0xff]
          %v630 = vld [vmem:[%s624 + $0x28] sm:$0xff]
          %v631 = vld [vmem:[%s624 + $0x30] sm:$0xff]
          %v632 = vld [vmem:[%s624 + $0x38] sm:$0xff]
          %v633 = vld [vmem:[%s624 + $0x40] sm:$0xff]
          %v634 = vld [vmem:[%s624 + $0x48] sm:$0xff]
          %v635 = vld [vmem:[%s624 + $0x50] sm:$0xff]
          %v636 = vld [vmem:[%s624 + $0x58] sm:$0xff]
          %v637 = vld [vmem:[%s624 + $0x60] sm:$0xff]
          %v638 = vld [vmem:[%s624 + $0x68] sm:$0xff]
          %v639 = vld [vmem:[%s624 + $0x70] sm:$0xff]
          %v640 = vld [vmem:[%s624 + $0x78] sm:$0xff]
          %s641 = scalar_lea.vmem [#allocation8], 2
          %v642 = vld [vmem:[%s641] sm:$0x1]
          %643 = vmatprep.subr.mxu0 0.0
          %644 = vmatpush1.msra.mxu0 %v640
          %645 = vmatprep.subr.mxu0 0.0
          %646 = vmatpush1.msra.mxu0 %v639
          %647 = vmatprep.subr.mxu0 0.0
          %648 = vmatpush1.msra.mxu0 %v638
          %649 = vmatprep.subr.mxu0 0.0
          %650 = vmatpush1.msra.mxu0 %v637
          %651 = vmatprep.subr.mxu0 0.0
          %652 = vmatpush1.msra.mxu0 %v636
          %653 = vmatprep.subr.mxu0 0.0
          %654 = vmatpush1.msra.mxu0 %v635
          %655 = vmatprep.subr.mxu0 0.0
          %656 = vmatpush1.msra.mxu0 %v634
          %657 = vmatprep.subr.mxu0 0.0
          %658 = vmatpush1.msra.mxu0 %v633
          %659 = vmatprep.subr.mxu0 0.0
          %660 = vmatpush1.msra.mxu0 %v632
          %661 = vmatprep.subr.mxu0 0.0
          %662 = vmatpush1.msra.mxu0 %v631
          %663 = vmatprep.subr.mxu0 0.0
          %664 = vmatpush1.msra.mxu0 %v630
          %665 = vmatprep.subr.mxu0 0.0
          %666 = vmatpush1.msra.mxu0 %v629
          %667 = vmatprep.subr.mxu0 0.0
          %668 = vmatpush1.msra.mxu0 %v628
          %669 = vmatprep.subr.mxu0 0.0
          %670 = vmatpush1.msra.mxu0 %v627
          %671 = vmatprep.subr.mxu0 0.0
          %672 = vmatpush1.msra.mxu0 %v626
          %673 = vmatprep.subr.mxu0 0.0
          %674 = vmatpush1.msra.mxu0 %v625
          %675 = vmatprep.subr.mxu0 0.0
          %676 = vmatpush2.msra.mxu0 0.0
          %677 = vmatprep.subr.mxu0 0.0
          %678 = vmatpush2.msra.mxu0 0.0
          %679 = vmatprep.subr.mxu0 0.0
          %680 = vmatpush2.msra.mxu0 0.0
          %681 = vmatprep.subr.mxu0 0.0
          %682 = vmatpush2.msra.mxu0 0.0
          %683 = vmatprep.subr.mxu0 0.0
          %684 = vmatpush2.msra.mxu0 0.0
          %685 = vmatprep.subr.mxu0 0.0
          %686 = vmatpush2.msra.mxu0 0.0
          %687 = vmatprep.subr.mxu0 0.0
          %688 = vmatpush2.msra.mxu0 0.0
          %689 = vmatprep.subr.mxu0 0.0
          %690 = vmatpush2.msra.mxu0 0.0
          %691 = vmatprep.subr.mxu0 0.0
          %692 = vmatpush2.msra.mxu0 0.0
          %693 = vmatprep.subr.mxu0 0.0
          %694 = vmatpush2.msra.mxu0 0.0
          %695 = vmatprep.subr.mxu0 0.0
          %696 = vmatpush2.msra.mxu0 0.0
          %697 = vmatprep.subr.mxu0 0.0
          %698 = vmatpush2.msra.mxu0 0.0
          %699 = vmatprep.subr.mxu0 0.0
          %700 = vmatpush2.msra.mxu0 0.0
          %701 = vmatprep.subr.mxu0 0.0
          %702 = vmatpush2.msra.mxu0 0.0
          %703 = vmatprep.subr.mxu0 0.0
          %704 = vmatpush2.msra.mxu0 0.0
          %705 = vmatprep.subr.mxu0 0.0
          %706 = vmatpush2.msra.mxu0 0.0
          %707 = vmatprep.mubr.f32.mxu0 0.0
          %708 = vmatmul.mubr.f32.gmra.mxu0 %v623
          %v709 = vpop.f32.mrf.mxu0
          %v710 = vadd.f32 %v642, %v709
          %v711 = vpop.f32.mrf.mxu0
          %712 = vdwg.mxu0
          %s713 = scalar_lea.vmem %s3, 2
          %v714 = vld [vmem:[%s713] sm:$0x1]
          %v715 = vmax.f32 %v710, %v714
          %s716 = scalar_lea.vmem [#allocation6], 384
          %v717 = vld [vmem:[%s716] sm:$0xff]
          %v718 = vld [vmem:[%s716 + $0x8] sm:$0xff]
          %v719 = vld [vmem:[%s716 + $0x10] sm:$0xff]
          %v720 = vld [vmem:[%s716 + $0x18] sm:$0xff]
          %v721 = vld [vmem:[%s716 + $0x20] sm:$0xff]
          %v722 = vld [vmem:[%s716 + $0x28] sm:$0xff]
          %v723 = vld [vmem:[%s716 + $0x30] sm:$0xff]
          %v724 = vld [vmem:[%s716 + $0x38] sm:$0xff]
          %v725 = vld [vmem:[%s716 + $0x40] sm:$0xff]
          %v726 = vld [vmem:[%s716 + $0x48] sm:$0xff]
          %v727 = vld [vmem:[%s716 + $0x50] sm:$0xff]
          %v728 = vld [vmem:[%s716 + $0x58] sm:$0xff]
          %v729 = vld [vmem:[%s716 + $0x60] sm:$0xff]
          %v730 = vld [vmem:[%s716 + $0x68] sm:$0xff]
          %v731 = vld [vmem:[%s716 + $0x70] sm:$0xff]
          %v732 = vld [vmem:[%s716 + $0x78] sm:$0xff]
          %s733 = scalar_lea.vmem [#allocation8], 3
          %v734 = vld [vmem:[%s733] sm:$0x1]
          %735 = vmatprep.subr.mxu0 0.0
          %736 = vmatpush1.msra.mxu0 %v732
          %737 = vmatprep.subr.mxu0 0.0
          %738 = vmatpush1.msra.mxu0 %v731
          %739 = vmatprep.subr.mxu0 0.0
          %740 = vmatpush1.msra.mxu0 %v730
          %741 = vmatprep.subr.mxu0 0.0
          %742 = vmatpush1.msra.mxu0 %v729
          %743 = vmatprep.subr.mxu0 0.0
          %744 = vmatpush1.msra.mxu0 %v728
          %745 = vmatprep.subr.mxu0 0.0
          %746 = vmatpush1.msra.mxu0 %v727
          %747 = vmatprep.subr.mxu0 0.0
          %748 = vmatpush1.msra.mxu0 %v726
          %749 = vmatprep.subr.mxu0 0.0
          %750 = vmatpush1.msra.mxu0 %v725
          %751 = vmatprep.subr.mxu0 0.0
          %752 = vmatpush1.msra.mxu0 %v724
          %753 = vmatprep.subr.mxu0 0.0
          %754 = vmatpush1.msra.mxu0 %v723
          %755 = vmatprep.subr.mxu0 0.0
          %756 = vmatpush1.msra.mxu0 %v722
          %757 = vmatprep.subr.mxu0 0.0
          %758 = vmatpush1.msra.mxu0 %v721
          %759 = vmatprep.subr.mxu0 0.0
          %760 = vmatpush1.msra.mxu0 %v720
          %761 = vmatprep.subr.mxu0 0.0
          %762 = vmatpush1.msra.mxu0 %v719
          %763 = vmatprep.subr.mxu0 0.0
          %764 = vmatpush1.msra.mxu0 %v718
          %765 = vmatprep.subr.mxu0 0.0
          %766 = vmatpush1.msra.mxu0 %v717
          %767 = vmatprep.subr.mxu0 0.0
          %768 = vmatpush2.msra.mxu0 0.0
          %769 = vmatprep.subr.mxu0 0.0
          %770 = vmatpush2.msra.mxu0 0.0
          %771 = vmatprep.subr.mxu0 0.0
          %772 = vmatpush2.msra.mxu0 0.0
          %773 = vmatprep.subr.mxu0 0.0
          %774 = vmatpush2.msra.mxu0 0.0
          %775 = vmatprep.subr.mxu0 0.0
          %776 = vmatpush2.msra.mxu0 0.0
          %777 = vmatprep.subr.mxu0 0.0
          %778 = vmatpush2.msra.mxu0 0.0
          %779 = vmatprep.subr.mxu0 0.0
          %780 = vmatpush2.msra.mxu0 0.0
          %781 = vmatprep.subr.mxu0 0.0
          %782 = vmatpush2.msra.mxu0 0.0
          %783 = vmatprep.subr.mxu0 0.0
          %784 = vmatpush2.msra.mxu0 0.0
          %785 = vmatprep.subr.mxu0 0.0
          %786 = vmatpush2.msra.mxu0 0.0
          %787 = vmatprep.subr.mxu0 0.0
          %788 = vmatpush2.msra.mxu0 0.0
          %789 = vmatprep.subr.mxu0 0.0
          %790 = vmatpush2.msra.mxu0 0.0
          %791 = vmatprep.subr.mxu0 0.0
          %792 = vmatpush2.msra.mxu0 0.0
          %793 = vmatprep.subr.mxu0 0.0
          %794 = vmatpush2.msra.mxu0 0.0
          %795 = vmatprep.subr.mxu0 0.0
          %796 = vmatpush2.msra.mxu0 0.0
          %797 = vmatprep.subr.mxu0 0.0
          %798 = vmatpush2.msra.mxu0 0.0
          %799 = vmatprep.mubr.f32.mxu0 0.0
          %800 = vmatmul.mubr.f32.gmra.mxu0 %v715
          %v801 = vpop.f32.mrf.mxu0
          %v802 = vadd.f32 %v734, %v801
          %v803 = vpop.f32.mrf.mxu0
          %804 = vdwg.mxu0
          %s805 = scalar_lea.vmem %s3, 3
          %v806 = vld [vmem:[%s805] sm:$0x1]
          %v807 = vmax.f32 %v802, %v806
          %s808 = scalar_lea.vmem [#allocation6], 512
          %v809 = vld [vmem:[%s808] sm:$0xff]
          %v810 = vld [vmem:[%s808 + $0x8] sm:$0xff]
          %v811 = vld [vmem:[%s808 + $0x10] sm:$0xff]
          %v812 = vld [vmem:[%s808 + $0x18] sm:$0xff]
          %v813 = vld [vmem:[%s808 + $0x20] sm:$0xff]
          %v814 = vld [vmem:[%s808 + $0x28] sm:$0xff]
          %v815 = vld [vmem:[%s808 + $0x30] sm:$0xff]
          %v816 = vld [vmem:[%s808 + $0x38] sm:$0xff]
          %v817 = vld [vmem:[%s808 + $0x40] sm:$0xff]
          %v818 = vld [vmem:[%s808 + $0x48] sm:$0xff]
          %v819 = vld [vmem:[%s808 + $0x50] sm:$0xff]
          %v820 = vld [vmem:[%s808 + $0x58] sm:$0xff]
          %v821 = vld [vmem:[%s808 + $0x60] sm:$0xff]
          %v822 = vld [vmem:[%s808 + $0x68] sm:$0xff]
          %v823 = vld [vmem:[%s808 + $0x70] sm:$0xff]
          %v824 = vld [vmem:[%s808 + $0x78] sm:$0xff]
          %s825 = scalar_lea.vmem [#allocation8], 4
          %v826 = vld [vmem:[%s825] sm:$0x1]
          %827 = vmatprep.subr.mxu0 0.0
          %828 = vmatpush1.msra.mxu0 %v824
          %829 = vmatprep.subr.mxu0 0.0
          %830 = vmatpush1.msra.mxu0 %v823
          %831 = vmatprep.subr.mxu0 0.0
          %832 = vmatpush1.msra.mxu0 %v822
          %833 = vmatprep.subr.mxu0 0.0
          %834 = vmatpush1.msra.mxu0 %v821
          %835 = vmatprep.subr.mxu0 0.0
          %836 = vmatpush1.msra.mxu0 %v820
          %837 = vmatprep.subr.mxu0 0.0
          %838 = vmatpush1.msra.mxu0 %v819
          %839 = vmatprep.subr.mxu0 0.0
          %840 = vmatpush1.msra.mxu0 %v818
          %841 = vmatprep.subr.mxu0 0.0
          %842 = vmatpush1.msra.mxu0 %v817
          %843 = vmatprep.subr.mxu0 0.0
          %844 = vmatpush1.msra.mxu0 %v816
          %845 = vmatprep.subr.mxu0 0.0
          %846 = vmatpush1.msra.mxu0 %v815
          %847 = vmatprep.subr.mxu0 0.0
          %848 = vmatpush1.msra.mxu0 %v814
          %849 = vmatprep.subr.mxu0 0.0
          %850 = vmatpush1.msra.mxu0 %v813
          %851 = vmatprep.subr.mxu0 0.0
          %852 = vmatpush1.msra.mxu0 %v812
          %853 = vmatprep.subr.mxu0 0.0
          %854 = vmatpush1.msra.mxu0 %v811
          %855 = vmatprep.subr.mxu0 0.0
          %856 = vmatpush1.msra.mxu0 %v810
          %857 = vmatprep.subr.mxu0 0.0
          %858 = vmatpush1.msra.mxu0 %v809
          %859 = vmatprep.subr.mxu0 0.0
          %860 = vmatpush2.msra.mxu0 0.0
          %861 = vmatprep.subr.mxu0 0.0
          %862 = vmatpush2.msra.mxu0 0.0
          %863 = vmatprep.subr.mxu0 0.0
          %864 = vmatpush2.msra.mxu0 0.0
          %865 = vmatprep.subr.mxu0 0.0
          %866 = vmatpush2.msra.mxu0 0.0
          %867 = vmatprep.subr.mxu0 0.0
          %868 = vmatpush2.msra.mxu0 0.0
          %869 = vmatprep.subr.mxu0 0.0
          %870 = vmatpush2.msra.mxu0 0.0
          %871 = vmatprep.subr.mxu0 0.0
          %872 = vmatpush2.msra.mxu0 0.0
          %873 = vmatprep.subr.mxu0 0.0
          %874 = vmatpush2.msra.mxu0 0.0
          %875 = vmatprep.subr.mxu0 0.0
          %876 = vmatpush2.msra.mxu0 0.0
          %877 = vmatprep.subr.mxu0 0.0
          %878 = vmatpush2.msra.mxu0 0.0
          %879 = vmatprep.subr.mxu0 0.0
          %880 = vmatpush2.msra.mxu0 0.0
          %881 = vmatprep.subr.mxu0 0.0
          %882 = vmatpush2.msra.mxu0 0.0
          %883 = vmatprep.subr.mxu0 0.0
          %884 = vmatpush2.msra.mxu0 0.0
          %885 = vmatprep.subr.mxu0 0.0
          %886 = vmatpush2.msra.mxu0 0.0
          %887 = vmatprep.subr.mxu0 0.0
          %888 = vmatpush2.msra.mxu0 0.0
          %889 = vmatprep.subr.mxu0 0.0
          %890 = vmatpush2.msra.mxu0 0.0
          %891 = vmatprep.mubr.f32.mxu0 0.0
          %892 = vmatmul.mubr.f32.gmra.mxu0 %v807
          %v893 = vpop.f32.mrf.mxu0
          %v894 = vadd.f32 %v826, %v893
          %v895 = vpop.f32.mrf.mxu0
          %896 = vdwg.mxu0
          %s897 = scalar_lea.vmem %s3, 4
          %v898 = vld [vmem:[%s897] sm:$0x1]
          %v899 = vmax.f32 %v894, %v898
          %vm900 = vcmask 253952
          %901 = vst.msk [vmem:[%s266] sm:$0x1] %vm900, %v899
        $region64: #{tpu_custom_call.1} parent=35 // pred_fallthru
          _
        %s902 = sand.u32 %s133, 1
        %s903 = scalar_lea.sflag [#allocation5], %s902
        %s904 = sand.u32 %s133, 1
        %s905 = scalar_lea.vmem [#allocation9], %s904
        // Predicated region
        $region65: #{tpu_custom_call.1} parent=35 // pred_check
          %p906 = pneg %p143
        $region66: #{tpu_custom_call.1} parent=35 // pred_check_branch
          %908 = sbr.rel (%p906) target = $region68
        $region67: #{tpu_custom_call.1} parent=35 // pred_region
          %s910 = ssub.s32 16, 16
          %911 = vsyncadd %s903, %s910
          %s912 = smul.addr %s26, 16
          %s913 = scalar_lea.hbm %s4, %s912
          %s915 = sshll.u32 %s905, 4
          %s916 = int_to_ptr.vmem [resolvable:$true] %s915
          %918 = dma.vmem_to_hbm [thread:$0]  %s916, 16, %s913, %s903
        $region68: #{tpu_custom_call.1} parent=35 // pred_fallthru
          _
      $region36: #{tpu_custom_call.1} parent=5 // pred_fallthru
        _
      %p919 = scmp.le.s32.totalorder 2, %s17
      // Predicated region
      $region69: #{tpu_custom_call.1} parent=5 // pred_check
        %p920 = pneg %p919
      $region70: #{tpu_custom_call.1} parent=5 // pred_check_branch
        %922 = sbr.rel (%p920) target = $region72
      $region71: #{tpu_custom_call.1} parent=5 // pred_region
        %s923 = ssub.s32 %s17, 2
        // Predicated region
        $region73: #{tpu_custom_call.1} parent=71 // pred_check
          %p924 = pneg %p149
        $region74: #{tpu_custom_call.1} parent=71 // pred_check_branch
          %926 = sbr.rel (%p924) target = $region76
        $region75: #{tpu_custom_call.1} parent=71 // pred_region
          %s927 = sand.u32 %s134, 1
          %s928 = scalar_lea.sflag [#allocation5], %s927
          %s929 = sand.u32 %s134, 1
          %s930 = scalar_lea.vmem [#allocation9], %s929
          %931 = dma.done %s928, 16
        $region76: #{tpu_custom_call.1} parent=71 // pred_fallthru
          _
      $region72: #{tpu_custom_call.1} parent=5 // pred_fallthru
        _
    $region6: #{tpu_custom_call.1} parent=1 // loop_footer
      %s21 = sadd.s32 1, %s17
    $region7: #{tpu_custom_call.1} parent=1 // loop_footer_branch
      %16 = sbr.rel target = $region3
    $region8: #{tpu_custom_call.1} parent=1 // loop_exit
      _
    %932 = vsyncpa [#allocation4], 1
    %s933 = scalar_lea.sflag [#allocation4], 1
    %934 = vsyncpa %s933, 1
    %935 = vsyncpa [#allocation7], 1
    %936 = vsyncpa [#allocation5], 1
    %s937 = scalar_lea.sflag [#allocation5], 1
    %938 = vsyncpa %s937, 1

// kernel: tpu_custom_call.1
$region0: #{tpu_custom_call.1}
  #allocation0 [shape = 'u32[]', space=smem, size = 0x4, offset = 0x4, fixed_abs, tag = 'smem constant byte address 0x4 - core index']
  #allocation1 [shape = 'u32[144,128]{1,0:T(1,128)}', space=vmem, size = 0x12000, scoped, tag = 'internal scratch']
  #allocation2 [shape = 'f32[1,32,128]{2,1,0:T(8,128)}', space=vmem, size = 0x4000, scoped, tag = 'scratch operand']
  %s0 = inlined_call_operand.hbm [shape: f32[2,32,784], index: 0, kind: input, shape index: {}]
  %s1 = inlined_call_operand.hbm [shape: f32[5,128,128], index: 1, kind: input, shape index: {}]
  %s2 = inlined_call_operand.hbm [shape: f32[5,1,128], index: 2, kind: input, shape index: {}]
  %s3 = inlined_call_operand.vmem [shape: f32[5,1,128], index: 3, kind: input, shape index: {}]
  %s4 = inlined_call_operand.hbm [shape: f32[2,1,32], index: 4, kind: output, shape index: {}]
  %s5 = sld [smem:[#allocation0]]
  $region77: #{tpu_custom_call.1} parent=0
    _
  %s7 = ssub.s32 1, %s5
  %s8 = scalar_select 0, %s7, %s5
  $region1: #{tpu_custom_call.1} parent=0
    #allocation3 [shape = 'u8[131072]{0}', space=vmem, size = 0x20000, scoped, tag = 'input window, operand 0']
    #allocation4 [shape = 's32[2]{0}', space=sflag, size = 0x8, scoped, tag = 'scoped memory for tpu_custom_call.1']
    #allocation5 [shape = 's32[2]{0}', space=sflag, size = 0x8, scoped, tag = 'scoped memory for tpu_custom_call.1']
    #allocation6 [shape = 'u8[327680]{0}', space=vmem, size = 0x50000, scoped, tag = 'input window, operand 1, single buffered']
    #allocation7 [shape = 's32[1]{0}', space=sflag, size = 0x4, scoped, tag = 'scoped memory for tpu_custom_call.1']
    #allocation8 [shape = 'u8[2560]{0}', space=vmem, size = 0xc00, scoped, tag = 'input window, operand 2, single buffered']
    #allocation9 [shape = 'u8[1024]{0}', space=vmem, size = 0x400, scoped, tag = 'output window, operand 0']
    %9 = vsyncpa [#allocation4], 0
    %s10 = scalar_lea.sflag [#allocation4], 1
    %11 = vsyncpa %s10, 0
    %12 = vsyncpa [#allocation7], 0
    %13 = vsyncpa [#allocation5], 0
    %s14 = scalar_lea.sflag [#allocation5], 1
    %15 = vsyncpa %s14, 0
    loop: start=0, step=1, limit=6
    $region2: #{tpu_custom_call.1} parent=1 // loop_pre_header
      _
    $region3: #{tpu_custom_call.1} parent=1 // loop_header
      %s17 = sphi 0, %s21
      %p18 = scmp.ge.s32.totalorder %s17, 6
      %s24 = sphi 0, %s36
      %s25 = sphi 0, %s32
      %s26 = sphi 0, %s24
      %s27 = sphi 0, %s25
      %s28 = sphi 0, %s26
      %s29 = sphi 0, %s27
      %s41 = sphi 0, %s43
      %s44 = sphi 0, %s41
      %s45 = sphi 0, %s44
      %s61 = sphi 0, %s45
      %s65 = sphi 0, %s65
      %s67 = sphi 0, %s65
      %s68 = sphi 0, %s67
      %s82 = sphi 0, %s68
      %s86 = sphi 0, %s86
      %s88 = sphi 0, %s86
      %s89 = sphi 0, %s88
      %s103 = sphi 0, %s89
      %s107 = sphi 0, %s107
      %s109 = sphi 0, %s107
      %s110 = sphi 0, %s109
      %s124 = sphi 0, %s110
      %s130 = sphi 0, %s132
      %s133 = sphi 0, %s130
      %s134 = sphi 0, %s133
      %s150 = sphi 0, %s134
    $region4: #{tpu_custom_call.1} parent=1 // loop_header_branch
      %20 = sbr.rel (%p18) target = $region8
    $region5: #{tpu_custom_call.1} parent=1 // loop_body
      %s22 = ssub.s32 %s17, 1
      %s23 = ssub.s32 %s17, 2
      %s30 = sadd.s32 1, %s25
      %p31 = scmp.ge.s32.totalorder %s30, 2
      %s32 = scalar_select %p31, 0, %s30
      %s33 = sadd.s32 1, %s24
      %s34 = scalar_select %p31, %s33, %s24
      %p35 = scmp.ge.s32.totalorder %s34, 2
      %s36 = scalar_select %p35, 0, %s34
      %s37 = ssub.s32 %s24, %s36
      %s38 = ssub.s32 %s25, %s32
      %s39 = sor.u32 %s37, %s38
      %p40 = scmp.eq.s32.totalorder %s39, 0
      %s42 = sadd.s32 %s41, 1
      %s43 = scalar_select %p40, %s41, %s42
      %p46 = pneg %p40
      %p47 = scmp.eq.s32.totalorder %s17, 3
      %p48 = por %p46, %p47
      %p49 = scmp.ne.s32.totalorder %s41, %s44
      %p50 = scmp.eq.s32.totalorder %s17, 0
      %p51 = por %p49, %p50
      %p52 = scmp.ne.s32.totalorder %s41, %s44
      %p53 = scmp.eq.s32.totalorder %s22, 3
      %p54 = por %p52, %p53
      %p55 = scmp.ne.s32.totalorder %s44, %s45
      %p56 = scmp.eq.s32.totalorder %s22, 0
      %p57 = por %p55, %p56
      %p58 = scmp.ne.s32.totalorder %s44, %s45
      %p59 = scmp.eq.s32.totalorder %s23, 3
      %p60 = por %p58, %p59
      %p62 = scmp.ne.s32.totalorder %s45, %s61
      %p63 = scmp.eq.s32.totalorder %s23, 0
      %p64 = por %p62, %p63
      %s66 = sadd.s32 %s65, 1
      %p69 = scmp.eq.s32.totalorder %s17, 3
      %p70 = scmp.ne.s32.totalorder %s65, %s67
      %p71 = scmp.eq.s32.totalorder %s17, 0
      %p72 = por %p70, %p71
      %p73 = scmp.ne.s32.totalorder %s65, %s67
      %p74 = scmp.eq.s32.totalorder %s22, 3
      %p75 = por %p73, %p74
      %p76 = scmp.ne.s32.totalorder %s67, %s68
      %p77 = scmp.eq.s32.totalorder %s22, 0
      %p78 = por %p76, %p77
      %p79 = scmp.ne.s32.totalorder %s67, %s68
      %p80 = scmp.eq.s32.totalorder %s23, 3
      %p81 = por %p79, %p80
      %p83 = scmp.ne.s32.totalorder %s68, %s82
      %p84 = scmp.eq.s32.totalorder %s23, 0
      %p85 = por %p83, %p84
      %s87 = sadd.s32 %s86, 1
      %p90 = scmp.eq.s32.totalorder %s17, 3
      %p91 = scmp.ne.s32.totalorder %s86, %s88
      %p92 = scmp.eq.s32.totalorder %s17, 0
      %p93 = por %p91, %p92
      %p94 = scmp.ne.s32.totalorder %s86, %s88
      %p95 = scmp.eq.s32.totalorder %s22, 3
      %p96 = por %p94, %p95
      %p97 = scmp.ne.s32.totalorder %s88, %s89
      %p98 = scmp.eq.s32.totalorder %s22, 0
      %p99 = por %p97, %p98
      %p100 = scmp.ne.s32.totalorder %s88, %s89
      %p101 = scmp.eq.s32.totalorder %s23, 3
      %p102 = por %p100, %p101
      %p104 = scmp.ne.s32.totalorder %s89, %s103
      %p105 = scmp.eq.s32.totalorder %s23, 0
      %p106 = por %p104, %p105
      %s108 = sadd.s32 %s107, 1
      %p111 = scmp.eq.s32.totalorder %s17, 3
      %p112 = scmp.ne.s32.totalorder %s107, %s109
      %p113 = scmp.eq.s32.totalorder %s17, 0
      %p114 = por %p112, %p113
      %p115 = scmp.ne.s32.totalorder %s107, %s109
      %p116 = scmp.eq.s32.totalorder %s22, 3
      %p117 = por %p115, %p116
      %p118 = scmp.ne.s32.totalorder %s109, %s110
      %p119 = scmp.eq.s32.totalorder %s22, 0
      %p120 = por %p118, %p119
      %p121 = scmp.ne.s32.totalorder %s109, %s110
      %p122 = scmp.eq.s32.totalorder %s23, 3
      %p123 = por %p121, %p122
      %p125 = scmp.ne.s32.totalorder %s110, %s124
      %p126 = scmp.eq.s32.totalorder %s23, 0
      %p127 = por %p125, %p126
      %s128 = ssub.s32 %s24, %s36
      %p129 = scmp.eq.s32.totalorder %s128, 0
      %s131 = sadd.s32 %s130, 1
      %s132 = scalar_select %p129, %s130, %s131
      %p135 = pneg %p129
      %p136 = scmp.eq.s32.totalorder %s17, 3
      %p137 = por %p135, %p136
      %p138 = scmp.ne.s32.totalorder %s130, %s133
      %p139 = scmp.eq.s32.totalorder %s17, 0
      %p140 = por %p138, %p139
      %p141 = scmp.ne.s32.totalorder %s130, %s133
      %p142 = scmp.eq.s32.totalorder %s22, 3
      %p143 = por %p141, %p142
      %p144 = scmp.ne.s32.totalorder %s133, %s134
      %p145 = scmp.eq.s32.totalorder %s22, 0
      %p146 = por %p144, %p145
      %p147 = scmp.ne.s32.totalorder %s133, %s134
      %p148 = scmp.eq.s32.totalorder %s23, 3
      %p149 = por %p147, %p148
      %p151 = scmp.ne.s32.totalorder %s134, %s150
      %p152 = scmp.eq.s32.totalorder %s23, 0
      %p153 = por %p151, %p152
      %p154 = scmp.le.s32.totalorder 1, %s17
      %p155 = scmp.lt.s32.totalorder %s17, 5
      %p156 = pnand %p154, %p155
      %p157 = pneg %p156
      // Predicated region
      $region9: #{tpu_custom_call.1} parent=5 // pred_check
        _
      $region10: #{tpu_custom_call.1} parent=5 // pred_check_branch
        %159 = sbr.rel (%p156) target = $region12
      $region11: #{tpu_custom_call.1} parent=5 // pred_region
        %s160 = ssub.s32 %s17, 1
        // Predicated region
        $region13: #{tpu_custom_call.1} parent=11 // pred_check
          %p161 = pneg %p78
        $region14: #{tpu_custom_call.1} parent=11 // pred_check_branch
          %163 = sbr.rel (%p161) target = $region16
        $region15: #{tpu_custom_call.1} parent=11 // pred_region
          %s165 = ssub.s32 10240, 10240
          %166 = vsyncadd [#allocation7], %s165
          %s167 = sshll.u32 [#allocation6], 4
          %s168 = int_to_ptr.vmem [resolvable:$true] %s167
          %173 = dma.hbm_to_vmem [thread:$0]  %s1, 10240, %s168, [#allocation7], 128, 128, 8
        $region16: #{tpu_custom_call.1} parent=11 // pred_fallthru
          _
        // Predicated region
        $region17: #{tpu_custom_call.1} parent=11 // pred_check
          %p174 = pneg %p99
        $region18: #{tpu_custom_call.1} parent=11 // pred_check_branch
          %176 = sbr.rel (%p174) target = $region20
        $region19: #{tpu_custom_call.1} parent=11 // pred_region
          %s178 = ssub.s32 80, 80
          %179 = vsyncadd [#allocation7], %s178
          %s180 = sshll.u32 [#allocation8], 4
          %s181 = int_to_ptr.vmem [resolvable:$true] %s180
          %186 = dma.hbm_to_vmem [thread:$0]  %s2, 80, %s181, [#allocation7], 16, 16, 1
        $region20: #{tpu_custom_call.1} parent=11 // pred_fallthru
          _
        // Predicated region
        $region21: #{tpu_custom_call.1} parent=11 // pred_check
          %p187 = pneg %p120
        $region22: #{tpu_custom_call.1} parent=11 // pred_check_branch
          %189 = sbr.rel (%p187) target = $region24
        $region23: #{tpu_custom_call.1} parent=11 // pred_region
          _
        $region24: #{tpu_custom_call.1} parent=11 // pred_fallthru
          _
      $region12: #{tpu_custom_call.1} parent=5 // pred_fallthru
        _
      %p190 = scmp.lt.s32.totalorder %s17, 4
      // Predicated region
      $region25: #{tpu_custom_call.1} parent=5 // pred_check
        %p191 = pneg %p190
      $region26: #{tpu_custom_call.1} parent=5 // pred_check_branch
        %193 = sbr.rel (%p191) target = $region28
      $region27: #{tpu_custom_call.1} parent=5 // pred_region
        // Predicated region
        $region29: #{tpu_custom_call.1} parent=27 // pred_check
          %p194 = pneg %p51
        $region30: #{tpu_custom_call.1} parent=27 // pred_check_branch
          %196 = sbr.rel (%p194) target = $region32
        $region31: #{tpu_custom_call.1} parent=27 // pred_region
          %s197 = sand.u32 %s41, 1
          %s198 = scalar_lea.sflag [#allocation4], %s197
          %s199 = sand.u32 %s41, 1
          %s200 = smul.addr %s199, 128
          %s201 = scalar_lea.vmem [#allocation3], %s200
          %s202 = smul.u32 4, %s25
          %s203 = ssub.s32 7, %s202
          %p204 = scmp.lt.s32.totalorder %s203, 4
          %s205 = scalar_select %p204, %s203, 4
          %s206 = smul.u32 512, %s205
          %s208 = ssub.s32 2048, %s206
          %209 = vsyncadd %s198, %s208
          %p210 = scmp.ne.s32.totalorder 0, %s206
          %s211 = smul.addr %s24, 28
          %s212 = sadd.s32 %s202, %s211
          %s213 = smul.addr %s212, 128
          %s214 = scalar_lea.hbm %s0, %s213
          %s215 = smul.u32 %s205, 8
          %s216 = smul.u32 %s215, 4
          %s217 = sshll.u32 %s201, 4
          %s218 = int_to_ptr.vmem [resolvable:$true] %s217
          %s219 = sshll.u32 %s216, 4
          %223 = dma.hbm_to_vmem [thread:$0]  (%p210), %s214, %s219, %s218, %s198, 896, 512, %s215
        $region32: #{tpu_custom_call.1} parent=27 // pred_fallthru
          _
      $region28: #{tpu_custom_call.1} parent=5 // pred_fallthru
        _
      %p224 = scmp.le.s32.totalorder 1, %s17
      %p225 = scmp.lt.s32.totalorder %s17, 5
      %p226 = pnand %p224, %p225
      %p227 = pneg %p226
      // Predicated region
      $region33: #{tpu_custom_call.1} parent=5 // pred_check
        _
      $region34: #{tpu_custom_call.1} parent=5 // pred_check_branch
        %229 = sbr.rel (%p226) target = $region36
      $region35: #{tpu_custom_call.1} parent=5 // pred_region
        %s230 = ssub.s32 %s17, 1
        %s231 = sand.u32 %s44, 1
        %s232 = scalar_lea.sflag [#allocation4], %s231
        %s233 = sand.u32 %s44, 1
        %s234 = smul.addr %s233, 128
        %s235 = scalar_lea.vmem [#allocation3], %s234
        // Predicated region
        $region37: #{tpu_custom_call.1} parent=35 // pred_check
          %p236 = pneg %p57
        $region38: #{tpu_custom_call.1} parent=35 // pred_check_branch
          %238 = sbr.rel (%p236) target = $region40
        $region39: #{tpu_custom_call.1} parent=35 // pred_region
          %239 = dma.done %s232, 2048
        $region40: #{tpu_custom_call.1} parent=35 // pred_fallthru
          _
        // Predicated region
        $region41: #{tpu_custom_call.1} parent=35 // pred_check
          %p240 = pneg %p78
        $region42: #{tpu_custom_call.1} parent=35 // pred_check_branch
          %242 = sbr.rel (%p240) target = $region44
        $region43: #{tpu_custom_call.1} parent=35 // pred_region
          %243 = dma.done [#allocation7], 10240
        $region44: #{tpu_custom_call.1} parent=35 // pred_fallthru
          _
        // Predicated region
        $region45: #{tpu_custom_call.1} parent=35 // pred_check
          %p244 = pneg %p99
        $region46: #{tpu_custom_call.1} parent=35 // pred_check_branch
          %246 = sbr.rel (%p244) target = $region48
        $region47: #{tpu_custom_call.1} parent=35 // pred_region
          %247 = dma.done [#allocation7], 80
        $region48: #{tpu_custom_call.1} parent=35 // pred_fallthru
          _
        %s248 = sand.u32 %s44, 1
        %s249 = scalar_lea.sflag [#allocation4], %s248
        %s250 = sand.u32 %s44, 1
        %s251 = smul.addr %s250, 128
        %s252 = scalar_lea.vmem [#allocation3], %s251
        %p253 = pneg %p57
        %p254 = pneg %p54
        %p255 = pneg %p78
        %p256 = pneg %p75
        %p257 = pneg %p99
        %p258 = pneg %p96
        %p259 = pneg %p120
        %p260 = pneg %p117
        %p261 = pneg %p146
        %p262 = pneg %p143
        %s263 = sand.u32 %s133, 1
        %s264 = scalar_lea.sflag [#allocation5], %s263
        %s265 = sand.u32 %s133, 1
        %s266 = scalar_lea.vmem [#allocation9], %s265
        %s267 = smul.u32 4, %s27
        %s268 = ssub.s32 7, %s267
        %p269 = scmp.lt.s32.totalorder %s268, 4
        %s270 = scalar_select %p269, %s268, 4
        %s271 = smul.u32 512, %s270
        %p272 = scmp.eq.s32.totalorder %s27, 0
        // Predicated region
        $region49: #{tpu_custom_call.1} parent=35 // pred_check
          %p273 = pneg %p272
        $region50: #{tpu_custom_call.1} parent=35 // pred_check_branch
          %275 = sbr.rel (%p273) target = $region52
        $region51: #{tpu_custom_call.1} parent=35 // pred_region
          %276 = vst [vmem:[#allocation2] sm:$0xff] 0.0
          %277 = vst [vmem:[#allocation2 + $0x8] sm:$0xff] 0.0
          %278 = vst [vmem:[#allocation2 + $0x10] sm:$0xff] 0.0
          %279 = vst [vmem:[#allocation2 + $0x18] sm:$0xff] 0.0
        $region52: #{tpu_custom_call.1} parent=35 // pred_fallthru
          _
        %p280 = scmp.eq.s32.totalorder %s27, 1
        // Predicated region
        $region53: #{tpu_custom_call.1} parent=35 // pred_check
          %p281 = pneg %p280
        $region54: #{tpu_custom_call.1} parent=35 // pred_check_branch
          %283 = sbr.rel (%p281) target = $region56
        $region55: #{tpu_custom_call.1} parent=35 // pred_region
          %v284 = vld [vmem:[%s235] sm:$0xff]
          %v285 = vld [vmem:[%s235 + $0x20] sm:$0xff]
          %v286 = vld [vmem:[%s235 + $0x40] sm:$0xff]
          %v287 = vld [vmem:[%s235 + $0x60] sm:$0xff]
          %v288 = vlaneseq
          %v289 = vand.u32 %v288, 127
          %s290 = smul.u32 %s27, 512
          %v291 = vstv %s290
          %v292 = vadd.s32 %v291, %v289
          %vm293 = vcmp.lt.s32.totalorder %v292, 784
          %v294 = vsel %vm293, %v284, 0.0
          %v295 = vsel %vm293, %v285, 0.0
          %v296 = vsel %vm293, %v286, 0.0
          %v297 = vsel %vm293, %v287, 0.0
          %v298 = vld [vmem:[%s235 + $0x8] sm:$0xff]
          %v299 = vld [vmem:[%s235 + $0x28] sm:$0xff]
          %v300 = vld [vmem:[%s235 + $0x48] sm:$0xff]
          %v301 = vld [vmem:[%s235 + $0x68] sm:$0xff]
          %s302 = sadd.s32 %s290, 128
          %v303 = vstv %s302
          %v304 = vadd.s32 %v303, %v289
          %vm305 = vcmp.lt.s32.totalorder %v304, 784
          %v306 = vsel %vm305, %v298, 0.0
          %v307 = vsel %vm305, %v299, 0.0
          %v308 = vsel %vm305, %v300, 0.0
          %v309 = vsel %vm305, %v301, 0.0
          %v310 = vadd.f32 %v294, %v306
          %v311 = vadd.f32 %v295, %v307
          %v312 = vadd.f32 %v296, %v308
          %v313 = vadd.f32 %v297, %v309
          %v314 = vld [vmem:[%s235 + $0x10] sm:$0xff]
          %v315 = vld [vmem:[%s235 + $0x30] sm:$0xff]
          %v316 = vld [vmem:[%s235 + $0x50] sm:$0xff]
          %v317 = vld [vmem:[%s235 + $0x70] sm:$0xff]
          %s318 = sadd.s32 %s290, 256
          %v319 = vstv %s318
          %v320 = vadd.s32 %v319, %v289
          %vm321 = vcmp.lt.s32.totalorder %v320, 784
          %v322 = vsel %vm321, %v314, 0.0
          %v323 = vsel %vm321, %v315, 0.0
          %v324 = vsel %vm321, %v316, 0.0
          %v325 = vsel %vm321, %v317, 0.0
          %v326 = vadd.f32 %v310, %v322
          %v327 = vadd.f32 %v311, %v323
          %v328 = vadd.f32 %v312, %v324
          %v329 = vadd.f32 %v313, %v325
          %v330 = vld [vmem:[%s235 + $0x18] sm:$0xff]
          %v331 = vld [vmem:[%s235 + $0x38] sm:$0xff]
          %v332 = vld [vmem:[%s235 + $0x58] sm:$0xff]
          %v333 = vld [vmem:[%s235 + $0x78] sm:$0xff]
          %s334 = sadd.s32 %s290, 384
          %v335 = vstv %s334
          %v336 = vadd.s32 %v335, %v289
          %vm337 = vcmp.lt.s32.totalorder %v336, 784
          %v338 = vsel %vm337, %v330, 0.0
          %v339 = vsel %vm337, %v331, 0.0
          %v340 = vsel %vm337, %v332, 0.0
          %v341 = vsel %vm337, %v333, 0.0
          %v342 = vadd.f32 %v326, %v338
          %v343 = vadd.f32 %v327, %v339
          %v344 = vadd.f32 %v328, %v340
          %v345 = vadd.f32 %v329, %v341
          %v346 = vld [vmem:[#allocation2] sm:$0xff]
          %v347 = vld [vmem:[#allocation2 + $0x8] sm:$0xff]
          %v348 = vld [vmem:[#allocation2 + $0x10] sm:$0xff]
          %v349 = vld [vmem:[#allocation2 + $0x18] sm:$0xff]
          %v350 = vadd.f32 %v346, %v342
          %v351 = vadd.f32 %v347, %v343
          %v352 = vadd.f32 %v348, %v344
          %v353 = vadd.f32 %v349, %v345
          %354 = vst [vmem:[#allocation2] sm:$0xff] %v350
          %355 = vst [vmem:[#allocation2 + $0x8] sm:$0xff] %v351
          %356 = vst [vmem:[#allocation2 + $0x10] sm:$0xff] %v352
          %357 = vst [vmem:[#allocation2 + $0x18] sm:$0xff] %v353
        $region56: #{tpu_custom_call.1} parent=35 // pred_fallthru
          _
        %p358 = scmp.ne.s32.totalorder %s27, 1
        // Predicated region
        $region57: #{tpu_custom_call.1} parent=35 // pred_check
          %p359 = pneg %p358
        $region58: #{tpu_custom_call.1} parent=35 // pred_check_branch
          %361 = sbr.rel (%p359) target = $region60
        $region59: #{tpu_custom_call.1} parent=35 // pred_region
          %v362 = vld [vmem:[%s235] sm:$0xff]
          %v363 = vld [vmem:[%s235 + $0x20] sm:$0xff]
          %v364 = vld [vmem:[%s235 + $0x40] sm:$0xff]
          %v365 = vld [vmem:[%s235 + $0x60] sm:$0xff]
          %v366 = vld [vmem:[%s235 + $0x8] sm:$0xff]
          %v367 = vld [vmem:[%s235 + $0x28] sm:$0xff]
          %v368 = vld [vmem:[%s235 + $0x48] sm:$0xff]
          %v369 = vld [vmem:[%s235 + $0x68] sm:$0xff]
          %v370 = vadd.f32 %v362, %v366
          %v371 = vadd.f32 %v363, %v367
          %v372 = vadd.f32 %v364, %v368
          %v373 = vadd.f32 %v365, %v369
          %v374 = vld [vmem:[%s235 + $0x10] sm:$0xff]
          %v375 = vld [vmem:[%s235 + $0x30] sm:$0xff]
          %v376 = vld [vmem:[%s235 + $0x50] sm:$0xff]
          %v377 = vld [vmem:[%s235 + $0x70] sm:$0xff]
          %v378 = vadd.f32 %v370, %v374
          %v379 = vadd.f32 %v371, %v375
          %v380 = vadd.f32 %v372, %v376
          %v381 = vadd.f32 %v373, %v377
          %v382 = vld [vmem:[%s235 + $0x18] sm:$0xff]
          %v383 = vld [vmem:[%s235 + $0x38] sm:$0xff]
          %v384 = vld [vmem:[%s235 + $0x58] sm:$0xff]
          %v385 = vld [vmem:[%s235 + $0x78] sm:$0xff]
          %v386 = vadd.f32 %v378, %v382
          %v387 = vadd.f32 %v379, %v383
          %v388 = vadd.f32 %v380, %v384
          %v389 = vadd.f32 %v381, %v385
          %v390 = vld [vmem:[#allocation2] sm:$0xff]
          %v391 = vld [vmem:[#allocation2 + $0x8] sm:$0xff]
          %v392 = vld [vmem:[#allocation2 + $0x10] sm:$0xff]
          %v393 = vld [vmem:[#allocation2 + $0x18] sm:$0xff]
          %v394 = vadd.f32 %v390, %v386
          %v395 = vadd.f32 %v391, %v387
          %v396 = vadd.f32 %v392, %v388
          %v397 = vadd.f32 %v393, %v389
          %398 = vst [vmem:[#allocation2] sm:$0xff] %v394
          %399 = vst [vmem:[#allocation2 + $0x8] sm:$0xff] %v395
          %400 = vst [vmem:[#allocation2 + $0x10] sm:$0xff] %v396
          %401 = vst [vmem:[#allocation2 + $0x18] sm:$0xff] %v397
        $region60: #{tpu_custom_call.1} parent=35 // pred_fallthru
          _
        // Predicated region
        $region61: #{tpu_custom_call.1} parent=35 // pred_check
          %p402 = pneg %p280
        $region62: #{tpu_custom_call.1} parent=35 // pred_check_branch
          %404 = sbr.rel (%p402) target = $region64
        $region63: #{tpu_custom_call.1} parent=35 // pred_region
          %v405 = vld [vmem:[#allocation2] sm:$0xff]
          %v406 = vld [vmem:[#allocation2 + $0x8] sm:$0xff]
          %v407 = vld [vmem:[#allocation2 + $0x10] sm:$0xff]
          %v408 = vld [vmem:[#allocation2 + $0x18] sm:$0xff]
          %409 = vadd.xlane.f32.xlu0 %v405
          %v410 = vpop.xlane.xlu0 %409
          %411 = vadd.xlane.f32.xlu0 %v406
          %v412 = vpop.xlane.xlu0 %411
          %413 = vadd.xlane.f32.xlu0 %v407
          %v414 = vpop.xlane.xlu0 %413
          %415 = vadd.xlane.f32.xlu0 %v408
          %v416 = vpop.xlane.xlu0 %415
          %v417 = vmul.f32 %v410, 0.0012755102
          %v418 = vmul.f32 %v412, 0.0012755102
          %v419 = vmul.f32 %v414, 0.0012755102
          %v420 = vmul.f32 %v416, 0.0012755102
          %v421 = vld [vmem:[#allocation6] sm:$0xff]
          %v422 = vld [vmem:[#allocation6 + $0x8] sm:$0xff]
          %v423 = vld [vmem:[#allocation6 + $0x10] sm:$0xff]
          %v424 = vld [vmem:[#allocation6 + $0x18] sm:$0xff]
          %v425 = vld [vmem:[#allocation8] sm:$0x1]
          %v430 = vlaneseq
          %v431 = vand.u32 %v430, 127
          %v432 = vlaneseq
          %v433 = vshrl.u32 %v432, 7
          %v434 = vsub.s32 %v431, %v433
          %v435 = vrot.slane %v417, %v434
          %v436 = vadd.s32 %v431, 4294967288
          %v437 = vlaneseq
          %v438 = vshrl.u32 %v437, 7
          %v439 = vsub.s32 %v436, %v438
          %v440 = vrot.slane %v418, %v439
          %vm441 = vcmask 130112
          %v442 = vsel %vm441, %v440, %v435
          %v443 = vadd.s32 %v431, 4294967280
          %v444 = vlaneseq
          %v445 = vshrl.u32 %v444, 7
          %v446 = vsub.s32 %v443, %v445
          %v447 = vrot.slane %v419, %v446
          %vm448 = vcmask 195712
          %v449 = vsel %vm448, %v447, %v442
          %v450 = vadd.s32 %v431, 4294967272
          %v451 = vlaneseq
          %v452 = vshrl.u32 %v451, 7
          %v453 = vsub.s32 %v450, %v452
          %v454 = vrot.slane %v420, %v453
          %vm455 = vcmask 261312
          %v456 = vsel %vm455, %v454, %v449
          %vm457 = vcmask 261120
          %v458 = vsel %vm457, %v456, 0
          %460 = vmatprep.subr.mxu0 0.0
          %461 = vmatpush1.msra.mxu0 0.0
          %462 = vmatprep.subr.mxu0 0.0
          %463 = vmatpush1.msra.mxu0 0.0
          %464 = vmatprep.subr.mxu0 0.0
          %465 = vmatpush1.msra.mxu0 0.0
          %466 = vmatprep.subr.mxu0 0.0
          %467 = vmatpush1.msra.mxu0 0.0
          %468 = vmatprep.subr.mxu0 0.0
          %469 = vmatpush1.msra.mxu0 0.0
          %470 = vmatprep.subr.mxu0 0.0
          %471 = vmatpush1.msra.mxu0 0.0
          %472 = vmatprep.subr.mxu0 0.0
          %473 = vmatpush1.msra.mxu0 0.0
          %474 = vmatprep.subr.mxu0 0.0
          %475 = vmatpush1.msra.mxu0 0.0
          %476 = vmatprep.subr.mxu0 0.0
          %477 = vmatpush1.msra.mxu0 0.0
          %478 = vmatprep.subr.mxu0 0.0
          %479 = vmatpush1.msra.mxu0 0.0
          %480 = vmatprep.subr.mxu0 0.0
          %481 = vmatpush1.msra.mxu0 0.0
          %482 = vmatprep.subr.mxu0 0.0
          %483 = vmatpush1.msra.mxu0 0.0
          %484 = vmatprep.subr.mxu0 0.0
          %485 = vmatpush1.msra.mxu0 %v424
          %486 = vmatprep.subr.mxu0 0.0
          %487 = vmatpush1.msra.mxu0 %v423
          %488 = vmatprep.subr.mxu0 0.0
          %489 = vmatpush1.msra.mxu0 %v422
          %490 = vmatprep.subr.mxu0 0.0
          %491 = vmatpush1.msra.mxu0 %v421
          %492 = vmatprep.subr.mxu0 0.0
          %493 = vmatpush2.msra.mxu0 0.0
          %494 = vmatprep.subr.mxu0 0.0
          %495 = vmatpush2.msra.mxu0 0.0
          %496 = vmatprep.subr.mxu0 0.0
          %497 = vmatpush2.msra.mxu0 0.0
          %498 = vmatprep.subr.mxu0 0.0
          %499 = vmatpush2.msra.mxu0 0.0
          %500 = vmatprep.subr.mxu0 0.0
          %501 = vmatpush2.msra.mxu0 0.0
          %502 = vmatprep.subr.mxu0 0.0
          %503 = vmatpush2.msra.mxu0 0.0
          %504 = vmatprep.subr.mxu0 0.0
          %505 = vmatpush2.msra.mxu0 0.0
          %506 = vmatprep.subr.mxu0 0.0
          %507 = vmatpush2.msra.mxu0 0.0
          %508 = vmatprep.subr.mxu0 0.0
          %509 = vmatpush2.msra.mxu0 0.0
          %510 = vmatprep.subr.mxu0 0.0
          %511 = vmatpush2.msra.mxu0 0.0
          %512 = vmatprep.subr.mxu0 0.0
          %513 = vmatpush2.msra.mxu0 0.0
          %514 = vmatprep.subr.mxu0 0.0
          %515 = vmatpush2.msra.mxu0 0.0
          %516 = vmatprep.subr.mxu0 0.0
          %517 = vmatpush2.msra.mxu0 0.0
          %518 = vmatprep.subr.mxu0 0.0
          %519 = vmatpush2.msra.mxu0 0.0
          %520 = vmatprep.subr.mxu0 0.0
          %521 = vmatpush2.msra.mxu0 0.0
          %522 = vmatprep.subr.mxu0 0.0
          %523 = vmatpush2.msra.mxu0 0.0
          %524 = vmatprep.mubr.f32.mxu0 0.0
          %525 = vmatmul.mubr.f32.gmra.mxu0 %v458
          %v526 = vpop.f32.mrf.mxu0
          %v527 = vadd.f32 %v425, %v526
          %v528 = vpop.f32.mrf.mxu0
          %529 = vdwg.mxu0
          %v530 = vld [vmem:[%s3] sm:$0x1]
          %v531 = vmax.f32 %v527, %v530
          %s532 = scalar_lea.vmem [#allocation6], 128
          %v533 = vld [vmem:[%s532] sm:$0xff]
          %v534 = vld [vmem:[%s532 + $0x8] sm:$0xff]
          %v535 = vld [vmem:[%s532 + $0x10] sm:$0xff]
          %v536 = vld [vmem:[%s532 + $0x18] sm:$0xff]
          %v537 = vld [vmem:[%s532 + $0x20] sm:$0xff]
          %v538 = vld [vmem:[%s532 + $0x28] sm:$0xff]
          %v539 = vld [vmem:[%s532 + $0x30] sm:$0xff]
          %v540 = vld [vmem:[%s532 + $0x38] sm:$0xff]
          %v541 = vld [vmem:[%s532 + $0x40] sm:$0xff]
          %v542 = vld [vmem:[%s532 + $0x48] sm:$0xff]
          %v543 = vld [vmem:[%s532 + $0x50] sm:$0xff]
          %v544 = vld [vmem:[%s532 + $0x58] sm:$0xff]
          %v545 = vld [vmem:[%s532 + $0x60] sm:$0xff]
          %v546 = vld [vmem:[%s532 + $0x68] sm:$0xff]
          %v547 = vld [vmem:[%s532 + $0x70] sm:$0xff]
          %v548 = vld [vmem:[%s532 + $0x78] sm:$0xff]
          %s549 = scalar_lea.vmem [#allocation8], 1
          %v550 = vld [vmem:[%s549] sm:$0x1]
          %551 = vmatprep.subr.mxu0 0.0
          %552 = vmatpush1.msra.mxu0 %v548
          %553 = vmatprep.subr.mxu0 0.0
          %554 = vmatpush1.msra.mxu0 %v547
          %555 = vmatprep.subr.mxu0 0.0
          %556 = vmatpush1.msra.mxu0 %v546
          %557 = vmatprep.subr.mxu0 0.0
          %558 = vmatpush1.msra.mxu0 %v545
          %559 = vmatprep.subr.mxu0 0.0
          %560 = vmatpush1.msra.mxu0 %v544
          %561 = vmatprep.subr.mxu0 0.0
          %562 = vmatpush1.msra.mxu0 %v543
          %563 = vmatprep.subr.mxu0 0.0
          %564 = vmatpush1.msra.mxu0 %v542
          %565 = vmatprep.subr.mxu0 0.0
          %566 = vmatpush1.msra.mxu0 %v541
          %567 = vmatprep.subr.mxu0 0.0
          %568 = vmatpush1.msra.mxu0 %v540
          %569 = vmatprep.subr.mxu0 0.0
          %570 = vmatpush1.msra.mxu0 %v539
          %571 = vmatprep.subr.mxu0 0.0
          %572 = vmatpush1.msra.mxu0 %v538
          %573 = vmatprep.subr.mxu0 0.0
          %574 = vmatpush1.msra.mxu0 %v537
          %575 = vmatprep.subr.mxu0 0.0
          %576 = vmatpush1.msra.mxu0 %v536
          %577 = vmatprep.subr.mxu0 0.0
          %578 = vmatpush1.msra.mxu0 %v535
          %579 = vmatprep.subr.mxu0 0.0
          %580 = vmatpush1.msra.mxu0 %v534
          %581 = vmatprep.subr.mxu0 0.0
          %582 = vmatpush1.msra.mxu0 %v533
          %583 = vmatprep.subr.mxu0 0.0
          %584 = vmatpush2.msra.mxu0 0.0
          %585 = vmatprep.subr.mxu0 0.0
          %586 = vmatpush2.msra.mxu0 0.0
          %587 = vmatprep.subr.mxu0 0.0
          %588 = vmatpush2.msra.mxu0 0.0
          %589 = vmatprep.subr.mxu0 0.0
          %590 = vmatpush2.msra.mxu0 0.0
          %591 = vmatprep.subr.mxu0 0.0
          %592 = vmatpush2.msra.mxu0 0.0
          %593 = vmatprep.subr.mxu0 0.0
          %594 = vmatpush2.msra.mxu0 0.0
          %595 = vmatprep.subr.mxu0 0.0
          %596 = vmatpush2.msra.mxu0 0.0
          %597 = vmatprep.subr.mxu0 0.0
          %598 = vmatpush2.msra.mxu0 0.0
          %599 = vmatprep.subr.mxu0 0.0
          %600 = vmatpush2.msra.mxu0 0.0
          %601 = vmatprep.subr.mxu0 0.0
          %602 = vmatpush2.msra.mxu0 0.0
          %603 = vmatprep.subr.mxu0 0.0
          %604 = vmatpush2.msra.mxu0 0.0
          %605 = vmatprep.subr.mxu0 0.0
          %606 = vmatpush2.msra.mxu0 0.0
          %607 = vmatprep.subr.mxu0 0.0
          %608 = vmatpush2.msra.mxu0 0.0
          %609 = vmatprep.subr.mxu0 0.0
          %610 = vmatpush2.msra.mxu0 0.0
          %611 = vmatprep.subr.mxu0 0.0
          %612 = vmatpush2.msra.mxu0 0.0
          %613 = vmatprep.subr.mxu0 0.0
          %614 = vmatpush2.msra.mxu0 0.0
          %615 = vmatprep.mubr.f32.mxu0 0.0
          %616 = vmatmul.mubr.f32.gmra.mxu0 %v531
          %v617 = vpop.f32.mrf.mxu0
          %v618 = vadd.f32 %v550, %v617
          %v619 = vpop.f32.mrf.mxu0
          %620 = vdwg.mxu0
          %s621 = scalar_lea.vmem %s3, 1
          %v622 = vld [vmem:[%s621] sm:$0x1]
          %v623 = vmax.f32 %v618, %v622
          %s624 = scalar_lea.vmem [#allocation6], 256
          %v625 = vld [vmem:[%s624] sm:$0xff]
          %v626 = vld [vmem:[%s624 + $0x8] sm:$0xff]
          %v627 = vld [vmem:[%s624 + $0x10] sm:$0xff]
          %v628 = vld [vmem:[%s624 + $0x18] sm:$0xff]
          %v629 = vld [vmem:[%s624 + $0x20] sm:$0xff]
          %v630 = vld [vmem:[%s624 + $0x28] sm:$0xff]
          %v631 = vld [vmem:[%s624 + $0x30] sm:$0xff]
          %v632 = vld [vmem:[%s624 + $0x38] sm:$0xff]
          %v633 = vld [vmem:[%s624 + $0x40] sm:$0xff]
          %v634 = vld [vmem:[%s624 + $0x48] sm:$0xff]
          %v635 = vld [vmem:[%s624 + $0x50] sm:$0xff]
          %v636 = vld [vmem:[%s624 + $0x58] sm:$0xff]
          %v637 = vld [vmem:[%s624 + $0x60] sm:$0xff]
          %v638 = vld [vmem:[%s624 + $0x68] sm:$0xff]
          %v639 = vld [vmem:[%s624 + $0x70] sm:$0xff]
          %v640 = vld [vmem:[%s624 + $0x78] sm:$0xff]
          %s641 = scalar_lea.vmem [#allocation8], 2
          %v642 = vld [vmem:[%s641] sm:$0x1]
          %643 = vmatprep.subr.mxu0 0.0
          %644 = vmatpush1.msra.mxu0 %v640
          %645 = vmatprep.subr.mxu0 0.0
          %646 = vmatpush1.msra.mxu0 %v639
          %647 = vmatprep.subr.mxu0 0.0
          %648 = vmatpush1.msra.mxu0 %v638
          %649 = vmatprep.subr.mxu0 0.0
          %650 = vmatpush1.msra.mxu0 %v637
          %651 = vmatprep.subr.mxu0 0.0
          %652 = vmatpush1.msra.mxu0 %v636
          %653 = vmatprep.subr.mxu0 0.0
          %654 = vmatpush1.msra.mxu0 %v635
          %655 = vmatprep.subr.mxu0 0.0
          %656 = vmatpush1.msra.mxu0 %v634
          %657 = vmatprep.subr.mxu0 0.0
          %658 = vmatpush1.msra.mxu0 %v633
          %659 = vmatprep.subr.mxu0 0.0
          %660 = vmatpush1.msra.mxu0 %v632
          %661 = vmatprep.subr.mxu0 0.0
          %662 = vmatpush1.msra.mxu0 %v631
          %663 = vmatprep.subr.mxu0 0.0
          %664 = vmatpush1.msra.mxu0 %v630
          %665 = vmatprep.subr.mxu0 0.0
          %666 = vmatpush1.msra.mxu0 %v629
          %667 = vmatprep.subr.mxu0 0.0
          %668 = vmatpush1.msra.mxu0 %v628
          %669 = vmatprep.subr.mxu0 0.0
          %670 = vmatpush1.msra.mxu0 %v627
          %671 = vmatprep.subr.mxu0 0.0
          %672 = vmatpush1.msra.mxu0 %v626
          %673 = vmatprep.subr.mxu0 0.0
          %674 = vmatpush1.msra.mxu0 %v625
          %675 = vmatprep.subr.mxu0 0.0
          %676 = vmatpush2.msra.mxu0 0.0
          %677 = vmatprep.subr.mxu0 0.0
          %678 = vmatpush2.msra.mxu0 0.0
          %679 = vmatprep.subr.mxu0 0.0
          %680 = vmatpush2.msra.mxu0 0.0
          %681 = vmatprep.subr.mxu0 0.0
          %682 = vmatpush2.msra.mxu0 0.0
          %683 = vmatprep.subr.mxu0 0.0
          %684 = vmatpush2.msra.mxu0 0.0
          %685 = vmatprep.subr.mxu0 0.0
          %686 = vmatpush2.msra.mxu0 0.0
          %687 = vmatprep.subr.mxu0 0.0
          %688 = vmatpush2.msra.mxu0 0.0
          %689 = vmatprep.subr.mxu0 0.0
          %690 = vmatpush2.msra.mxu0 0.0
          %691 = vmatprep.subr.mxu0 0.0
          %692 = vmatpush2.msra.mxu0 0.0
          %693 = vmatprep.subr.mxu0 0.0
          %694 = vmatpush2.msra.mxu0 0.0
          %695 = vmatprep.subr.mxu0 0.0
          %696 = vmatpush2.msra.mxu0 0.0
          %697 = vmatprep.subr.mxu0 0.0
          %698 = vmatpush2.msra.mxu0 0.0
          %699 = vmatprep.subr.mxu0 0.0
          %700 = vmatpush2.msra.mxu0 0.0
          %701 = vmatprep.subr.mxu0 0.0
          %702 = vmatpush2.msra.mxu0 0.0
          %703 = vmatprep.subr.mxu0 0.0
          %704 = vmatpush2.msra.mxu0 0.0
          %705 = vmatprep.subr.mxu0 0.0
          %706 = vmatpush2.msra.mxu0 0.0
          %707 = vmatprep.mubr.f32.mxu0 0.0
          %708 = vmatmul.mubr.f32.gmra.mxu0 %v623
          %v709 = vpop.f32.mrf.mxu0
          %v710 = vadd.f32 %v642, %v709
          %v711 = vpop.f32.mrf.mxu0
          %712 = vdwg.mxu0
          %s713 = scalar_lea.vmem %s3, 2
          %v714 = vld [vmem:[%s713] sm:$0x1]
          %v715 = vmax.f32 %v710, %v714
          %s716 = scalar_lea.vmem [#allocation6], 384
          %v717 = vld [vmem:[%s716] sm:$0xff]
          %v718 = vld [vmem:[%s716 + $0x8] sm:$0xff]
          %v719 = vld [vmem:[%s716 + $0x10] sm:$0xff]
          %v720 = vld [vmem:[%s716 + $0x18] sm:$0xff]
          %v721 = vld [vmem:[%s716 + $0x20] sm:$0xff]
          %v722 = vld [vmem:[%s716 + $0x28] sm:$0xff]
          %v723 = vld [vmem:[%s716 + $0x30] sm:$0xff]
          %v724 = vld [vmem:[%s716 + $0x38] sm:$0xff]
          %v725 = vld [vmem:[%s716 + $0x40] sm:$0xff]
          %v726 = vld [vmem:[%s716 + $0x48] sm:$0xff]
          %v727 = vld [vmem:[%s716 + $0x50] sm:$0xff]
          %v728 = vld [vmem:[%s716 + $0x58] sm:$0xff]
          %v729 = vld [vmem:[%s716 + $0x60] sm:$0xff]
          %v730 = vld [vmem:[%s716 + $0x68] sm:$0xff]
          %v731 = vld [vmem:[%s716 + $0x70] sm:$0xff]
          %v732 = vld [vmem:[%s716 + $0x78] sm:$0xff]
          %s733 = scalar_lea.vmem [#allocation8], 3
          %v734 = vld [vmem:[%s733] sm:$0x1]
          %735 = vmatprep.subr.mxu0 0.0
          %736 = vmatpush1.msra.mxu0 %v732
          %737 = vmatprep.subr.mxu0 0.0
          %738 = vmatpush1.msra.mxu0 %v731
          %739 = vmatprep.subr.mxu0 0.0
          %740 = vmatpush1.msra.mxu0 %v730
          %741 = vmatprep.subr.mxu0 0.0
          %742 = vmatpush1.msra.mxu0 %v729
          %743 = vmatprep.subr.mxu0 0.0
          %744 = vmatpush1.msra.mxu0 %v728
          %745 = vmatprep.subr.mxu0 0.0
          %746 = vmatpush1.msra.mxu0 %v727
          %747 = vmatprep.subr.mxu0 0.0
          %748 = vmatpush1.msra.mxu0 %v726
          %749 = vmatprep.subr.mxu0 0.0
          %750 = vmatpush1.msra.mxu0 %v725
          %751 = vmatprep.subr.mxu0 0.0
          %752 = vmatpush1.msra.mxu0 %v724
          %753 = vmatprep.subr.mxu0 0.0
          %754 = vmatpush1.msra.mxu0 %v723
          %755 = vmatprep.subr.mxu0 0.0
          %756 = vmatpush1.msra.mxu0 %v722
          %757 = vmatprep.subr.mxu0 0.0
          %758 = vmatpush1.msra.mxu0 %v721
          %759 = vmatprep.subr.mxu0 0.0
          %760 = vmatpush1.msra.mxu0 %v720
          %761 = vmatprep.subr.mxu0 0.0
          %762 = vmatpush1.msra.mxu0 %v719
          %763 = vmatprep.subr.mxu0 0.0
          %764 = vmatpush1.msra.mxu0 %v718
          %765 = vmatprep.subr.mxu0 0.0
          %766 = vmatpush1.msra.mxu0 %v717
          %767 = vmatprep.subr.mxu0 0.0
          %768 = vmatpush2.msra.mxu0 0.0
          %769 = vmatprep.subr.mxu0 0.0
          %770 = vmatpush2.msra.mxu0 0.0
          %771 = vmatprep.subr.mxu0 0.0
          %772 = vmatpush2.msra.mxu0 0.0
          %773 = vmatprep.subr.mxu0 0.0
          %774 = vmatpush2.msra.mxu0 0.0
          %775 = vmatprep.subr.mxu0 0.0
          %776 = vmatpush2.msra.mxu0 0.0
          %777 = vmatprep.subr.mxu0 0.0
          %778 = vmatpush2.msra.mxu0 0.0
          %779 = vmatprep.subr.mxu0 0.0
          %780 = vmatpush2.msra.mxu0 0.0
          %781 = vmatprep.subr.mxu0 0.0
          %782 = vmatpush2.msra.mxu0 0.0
          %783 = vmatprep.subr.mxu0 0.0
          %784 = vmatpush2.msra.mxu0 0.0
          %785 = vmatprep.subr.mxu0 0.0
          %786 = vmatpush2.msra.mxu0 0.0
          %787 = vmatprep.subr.mxu0 0.0
          %788 = vmatpush2.msra.mxu0 0.0
          %789 = vmatprep.subr.mxu0 0.0
          %790 = vmatpush2.msra.mxu0 0.0
          %791 = vmatprep.subr.mxu0 0.0
          %792 = vmatpush2.msra.mxu0 0.0
          %793 = vmatprep.subr.mxu0 0.0
          %794 = vmatpush2.msra.mxu0 0.0
          %795 = vmatprep.subr.mxu0 0.0
          %796 = vmatpush2.msra.mxu0 0.0
          %797 = vmatprep.subr.mxu0 0.0
          %798 = vmatpush2.msra.mxu0 0.0
          %799 = vmatprep.mubr.f32.mxu0 0.0
          %800 = vmatmul.mubr.f32.gmra.mxu0 %v715
          %v801 = vpop.f32.mrf.mxu0
          %v802 = vadd.f32 %v734, %v801
          %v803 = vpop.f32.mrf.mxu0
          %804 = vdwg.mxu0
          %s805 = scalar_lea.vmem %s3, 3
          %v806 = vld [vmem:[%s805] sm:$0x1]
          %v807 = vmax.f32 %v802, %v806
          %s808 = scalar_lea.vmem [#allocation6], 512
          %v809 = vld [vmem:[%s808] sm:$0xff]
          %v810 = vld [vmem:[%s808 + $0x8] sm:$0xff]
          %v811 = vld [vmem:[%s808 + $0x10] sm:$0xff]
          %v812 = vld [vmem:[%s808 + $0x18] sm:$0xff]
          %v813 = vld [vmem:[%s808 + $0x20] sm:$0xff]
          %v814 = vld [vmem:[%s808 + $0x28] sm:$0xff]
          %v815 = vld [vmem:[%s808 + $0x30] sm:$0xff]
          %v816 = vld [vmem:[%s808 + $0x38] sm:$0xff]
          %v817 = vld [vmem:[%s808 + $0x40] sm:$0xff]
          %v818 = vld [vmem:[%s808 + $0x48] sm:$0xff]
          %v819 = vld [vmem:[%s808 + $0x50] sm:$0xff]
          %v820 = vld [vmem:[%s808 + $0x58] sm:$0xff]
          %v821 = vld [vmem:[%s808 + $0x60] sm:$0xff]
          %v822 = vld [vmem:[%s808 + $0x68] sm:$0xff]
          %v823 = vld [vmem:[%s808 + $0x70] sm:$0xff]
          %v824 = vld [vmem:[%s808 + $0x78] sm:$0xff]
          %s825 = scalar_lea.vmem [#allocation8], 4
          %v826 = vld [vmem:[%s825] sm:$0x1]
          %827 = vmatprep.subr.mxu0 0.0
          %828 = vmatpush1.msra.mxu0 %v824
          %829 = vmatprep.subr.mxu0 0.0
          %830 = vmatpush1.msra.mxu0 %v823
          %831 = vmatprep.subr.mxu0 0.0
          %832 = vmatpush1.msra.mxu0 %v822
          %833 = vmatprep.subr.mxu0 0.0
          %834 = vmatpush1.msra.mxu0 %v821
          %835 = vmatprep.subr.mxu0 0.0
          %836 = vmatpush1.msra.mxu0 %v820
          %837 = vmatprep.subr.mxu0 0.0
          %838 = vmatpush1.msra.mxu0 %v819
          %839 = vmatprep.subr.mxu0 0.0
          %840 = vmatpush1.msra.mxu0 %v818
          %841 = vmatprep.subr.mxu0 0.0
          %842 = vmatpush1.msra.mxu0 %v817
          %843 = vmatprep.subr.mxu0 0.0
          %844 = vmatpush1.msra.mxu0 %v816
          %845 = vmatprep.subr.mxu0 0.0
          %846 = vmatpush1.msra.mxu0 %v815
          %847 = vmatprep.subr.mxu0 0.0
          %848 = vmatpush1.msra.mxu0 %v814
          %849 = vmatprep.subr.mxu0 0.0
          %850 = vmatpush1.msra.mxu0 %v813
          %851 = vmatprep.subr.mxu0 0.0
          %852 = vmatpush1.msra.mxu0 %v812
          %853 = vmatprep.subr.mxu0 0.0
          %854 = vmatpush1.msra.mxu0 %v811
          %855 = vmatprep.subr.mxu0 0.0
          %856 = vmatpush1.msra.mxu0 %v810
          %857 = vmatprep.subr.mxu0 0.0
          %858 = vmatpush1.msra.mxu0 %v809
          %859 = vmatprep.subr.mxu0 0.0
          %860 = vmatpush2.msra.mxu0 0.0
          %861 = vmatprep.subr.mxu0 0.0
          %862 = vmatpush2.msra.mxu0 0.0
          %863 = vmatprep.subr.mxu0 0.0
          %864 = vmatpush2.msra.mxu0 0.0
          %865 = vmatprep.subr.mxu0 0.0
          %866 = vmatpush2.msra.mxu0 0.0
          %867 = vmatprep.subr.mxu0 0.0
          %868 = vmatpush2.msra.mxu0 0.0
          %869 = vmatprep.subr.mxu0 0.0
          %870 = vmatpush2.msra.mxu0 0.0
          %871 = vmatprep.subr.mxu0 0.0
          %872 = vmatpush2.msra.mxu0 0.0
          %873 = vmatprep.subr.mxu0 0.0
          %874 = vmatpush2.msra.mxu0 0.0
          %875 = vmatprep.subr.mxu0 0.0
          %876 = vmatpush2.msra.mxu0 0.0
          %877 = vmatprep.subr.mxu0 0.0
          %878 = vmatpush2.msra.mxu0 0.0
          %879 = vmatprep.subr.mxu0 0.0
          %880 = vmatpush2.msra.mxu0 0.0
          %881 = vmatprep.subr.mxu0 0.0
          %882 = vmatpush2.msra.mxu0 0.0
          %883 = vmatprep.subr.mxu0 0.0
          %884 = vmatpush2.msra.mxu0 0.0
          %885 = vmatprep.subr.mxu0 0.0
          %886 = vmatpush2.msra.mxu0 0.0
          %887 = vmatprep.subr.mxu0 0.0
          %888 = vmatpush2.msra.mxu0 0.0
          %889 = vmatprep.subr.mxu0 0.0
          %890 = vmatpush2.msra.mxu0 0.0
          %891 = vmatprep.mubr.f32.mxu0 0.0
          %892 = vmatmul.mubr.f32.gmra.mxu0 %v807
          %v893 = vpop.f32.mrf.mxu0
          %v894 = vadd.f32 %v826, %v893
          %v895 = vpop.f32.mrf.mxu0
          %896 = vdwg.mxu0
          %s897 = scalar_lea.vmem %s3, 4
          %v898 = vld [vmem:[%s897] sm:$0x1]
          %v899 = vmax.f32 %v894, %v898
          %vm900 = vcmask 253952
          %901 = vst.msk [vmem:[%s266] sm:$0x1] %vm900, %v899
        $region64: #{tpu_custom_call.1} parent=35 // pred_fallthru
          _
        %s902 = sand.u32 %s133, 1
        %s903 = scalar_lea.sflag [#allocation5], %s902
        %s904 = sand.u32 %s133, 1
        %s905 = scalar_lea.vmem [#allocation9], %s904
        // Predicated region
        $region65: #{tpu_custom_call.1} parent=35 // pred_check
          %p906 = pneg %p143
        $region66: #{tpu_custom_call.1} parent=35 // pred_check_branch
          %908 = sbr.rel (%p906) target = $region68
        $region67: #{tpu_custom_call.1} parent=35 // pred_region
          %s910 = ssub.s32 16, 16
          %911 = vsyncadd %s903, %s910
          %s912 = smul.addr %s26, 16
          %s913 = scalar_lea.hbm %s4, %s912
          %s915 = sshll.u32 %s905, 4
          %s916 = int_to_ptr.vmem [resolvable:$true] %s915
          %918 = dma.vmem_to_hbm [thread:$0]  %s916, 16, %s913, %s903
        $region68: #{tpu_custom_call.1} parent=35 // pred_fallthru
          _
      $region36: #{tpu_custom_call.1} parent=5 // pred_fallthru
        _
      %p919 = scmp.le.s32.totalorder 2, %s17
      // Predicated region
      $region69: #{tpu_custom_call.1} parent=5 // pred_check
        %p920 = pneg %p919
      $region70: #{tpu_custom_call.1} parent=5 // pred_check_branch
        %922 = sbr.rel (%p920) target = $region72
      $region71: #{tpu_custom_call.1} parent=5 // pred_region
        %s923 = ssub.s32 %s17, 2
        // Predicated region
        $region73: #{tpu_custom_call.1} parent=71 // pred_check
          %p924 = pneg %p149
        $region74: #{tpu_custom_call.1} parent=71 // pred_check_branch
          %926 = sbr.rel (%p924) target = $region76
        $region75: #{tpu_custom_call.1} parent=71 // pred_region
          %s927 = sand.u32 %s134, 1
          %s928 = scalar_lea.sflag [#allocation5], %s927
          %s929 = sand.u32 %s134, 1
          %s930 = scalar_lea.vmem [#allocation9], %s929
          %931 = dma.done %s928, 16
        $region76: #{tpu_custom_call.1} parent=71 // pred_fallthru
          _
      $region72: #{tpu_custom_call.1} parent=5 // pred_fallthru
        _
    $region6: #{tpu_custom_call.1} parent=1 // loop_footer
      %s21 = sadd.s32 1, %s17
    $region7: #{tpu_custom_call.1} parent=1 // loop_footer_branch
      %16 = sbr.rel target = $region3
    $region8: #{tpu_custom_call.1} parent=1 // loop_exit
      _
    %932 = vsyncpa [#allocation4], 1
    %s933 = scalar_lea.sflag [#allocation4], 1
    %934 = vsyncpa %s933, 1
    %935 = vsyncpa [#allocation7], 1
    %936 = vsyncpa [#allocation5], 1
    %s937 = scalar_lea.sflag [#allocation5], 1
    %938 = vsyncpa %s937, 1

</llo_original>
